<compile_context>
chip_gen: v6e
topology: v6e:2x2x1
jax: 0.10.0
libtpu: 0.0.40
codegen_flags: <defaults>
</compile_context>

<pallas_src>
import numpy as np
import jax
import jax.numpy as jnp
from jax import lax
from jax.experimental import pallas as pl
from jax.experimental.pallas import tpu as pltpu


def _repblock_kernel(x_ref, w_ref, b_ref, o_ref, xp_ref):
    # x_ref : (H, W, Cin)      bf16 unpadded NHWC image (batch dim squeezed)
    # w_ref : (9*Cin, Cout)    bf16 re-parameterized 3x3 weights, tap-major rows
    # b_ref : (1, Cout)        f32 combined folded BN bias of both branches
    # o_ref : (H*W, Cout)      flat output slab (lane-compact, no channel pad)
    # xp_ref: (H+2, W+2, Cin)  bf16 VMEM scratch holding the halo-padded image
    H, W, Cin = x_ref.shape

    # 'same' zero padding done in VMEM.  Re-zero every grid step: the batch grid
    # axis is "parallel" (megacore), so a core may never run program_id()==0 and
    # a zero-once init would leave garbage borders in that core's scratch.
    xp_ref[...] = jnp.zeros_like(xp_ref)
    xp_ref[1:H + 1, 1:W + 1, :] = x_ref[...]

    # im2col with raw-Cin taps: contraction depth K = 9*Cin (no per-tap 128 pad;
    # Mosaic pads the contraction internally for the MXU).
    taps = []
    for ky in range(3):
        for kx in range(3):
            taps.append(xp_ref[ky:ky + H, kx:kx + W, :])        # (H, W, Cin)
    patches = jnp.concatenate(taps, axis=-1).reshape(H * W, 9 * Cin)

    # Single MXU matmul: (H*W, 9*Cin) @ (9*Cin, Cout), f32 accumulation.
    acc = jnp.dot(patches, w_ref[...], preferred_element_type=jnp.float32)

    # Folded BN bias of both branches + ReLU, kept in f32 (v5e-safe epilogue).
    acc = jnp.maximum(acc + b_ref[...], 0.0)
    o_ref[...] = acc.astype(o_ref.dtype)


def rep_block_3x3_pallas(x_nchw, w3_hwio, w1_io, bias, out_dtype=jnp.float32):
    """RepBlock3x3 forward (eval-mode BN folded into weights/bias).

    x_nchw : (N, Cin, H, W) float32
    w3_hwio: (3, 3, Cin, Cout) BN-folded 3x3 weights
    w1_io  : (Cin, Cout)       BN-folded 1x1 weights
    bias   : (Cout,)           combined folded BN bias of both branches
    returns: (N, Cout, H, W) out_dtype
    """
    N, Cin, H, W = x_nchw.shape
    Cout = w3_hwio.shape[-1]

    # RepVGG re-parameterization: fold the 1x1 branch into the 3x3 center tap.
    w_comb = w3_hwio.astype(jnp.float32).at[1, 1].add(w1_io.astype(jnp.float32))
    # Tap-major contraction rows ((ky, kx, ci)) matching the kernel's tap concat.
    w_mat = w_comb.reshape(9 * Cin, Cout).astype(jnp.bfloat16)
    b2d = bias.astype(jnp.float32).reshape(1, Cout)

    # NCHW -> NHWC + bf16 cast (one fused XLA copy). No spatial / channel padded
    # copy of the input is materialized in HBM any more.
    x_nhwc = jnp.transpose(x_nchw, (0, 2, 3, 1)).astype(jnp.bfloat16)

    out_flat = pl.pallas_call(
        _repblock_kernel,
        out_shape=jax.ShapeDtypeStruct((N, H * W, Cout), out_dtype),
        grid=(N,),
        in_specs=[
            pl.BlockSpec((None, H, W, Cin), lambda n: (n, 0, 0, 0)),
            # Grid-invariant operands (constant index_map -> fetched once).
            pl.BlockSpec((9 * Cin, Cout), lambda n: (0, 0)),
            pl.BlockSpec((1, Cout), lambda n: (0, 0)),
        ],
        out_specs=pl.BlockSpec((None, H * W, Cout), lambda n: (n, 0, 0)),
        scratch_shapes=[pltpu.VMEM((H + 2, W + 2, Cin), jnp.bfloat16)],
        compiler_params=pltpu.CompilerParams(
            dimension_semantics=("parallel",)),
    )(x_nhwc, w_mat, b2d)

    # (N, H*W, Cout) -> (N, Cout, H, W).
    out_nhwc = out_flat.reshape(N, H, W, Cout)
    return jnp.transpose(out_nhwc, (0, 3, 1, 2))


def _fold_bn(gamma, beta, mean, var, eps=1e-3):
    scale = gamma / jnp.sqrt(var + eps)
    bias = beta - mean * scale
    return scale, bias


def _reference(x_nchw, w3_hwio, w1_io, bias):
    """Two-branch f32 reference matching the PyTorch module semantics."""
    x_nhwc = jnp.transpose(x_nchw, (0, 2, 3, 1))
    y3 = lax.conv_general_dilated(
        x_nhwc, w3_hwio, window_strides=(1, 1), padding="SAME",
        dimension_numbers=("NHWC", "HWIO", "NHWC"),
        precision=lax.Precision.HIGHEST)
    y1 = jnp.einsum("nhwi,io->nhwo", x_nhwc, w1_io,
                    precision=lax.Precision.HIGHEST)
    y = jnp.maximum(y3 + y1 + bias[None, None, None, :], 0.0)
    return jnp.transpose(y, (0, 3, 1, 2))


def _conv3x3_reference(x_nchw, w_hwio, bias):
    """Single re-parameterized 3x3 conv reference (independent XLA conv)."""
    x_nhwc = jnp.transpose(x_nchw, (0, 2, 3, 1))
    y = lax.conv_general_dilated(
        x_nhwc, w_hwio, window_strides=(1, 1), padding="SAME",
        dimension_numbers=("NHWC", "HWIO", "NHWC"),
        precision=lax.Precision.HIGHEST)
    y = jnp.maximum(y + bias[None, None, None, :], 0.0)
    return jnp.transpose(y, (0, 3, 1, 2))


if __name__ == "__main__":
    key = jax.random.PRNGKey(0)
    N, Cin, H, W = 2, 4, 16, 16
    Cout = 8

    ks = jax.random.split(key, 11)
    x = jax.random.normal(ks[0], (N, Cin, H, W), jnp.float32)

    # Conv weights (kaiming-normal-ish deterministic init), HWIO layout.
    w3 = jax.random.normal(ks[1], (3, 3, Cin, Cout), jnp.float32) * np.sqrt(
        2.0 / (Cin * 9))
    w1 = jax.random.normal(ks[2], (1, 1, Cin, Cout), jnp.float32) * np.sqrt(
        2.0 / Cin)

    # Deterministic BatchNorm params (running stats, eval semantics).
    g3 = 1.0 + 0.1 * jax.random.normal(ks[3], (Cout,), jnp.float32)
    b3 = 0.1 * jax.random.normal(ks[4], (Cout,), jnp.float32)
    m3 = 0.1 * jax.random.normal(ks[5], (Cout,), jnp.float32)
    v3 = jnp.abs(1.0 + 0.1 * jax.random.normal(ks[6], (Cout,), jnp.float32))
    g1 = 1.0 + 0.1 * jax.random.normal(ks[7], (Cout,), jnp.float32)
    b1 = 0.1 * jax.random.normal(ks[8], (Cout,), jnp.float32)
    m1 = 0.1 * jax.random.normal(ks[9], (Cout,), jnp.float32)
    v1 = jnp.abs(1.0 + 0.1 * jax.random.normal(ks[10], (Cout,), jnp.float32))

    s3, bias3 = _fold_bn(g3, b3, m3, v3)
    s1, bias1 = _fold_bn(g1, b1, m1, v1)

    w3_folded = w3 * s3[None, None, None, :]                  # (3,3,Cin,Cout)
    w1_folded = (w1 * s1[None, None, None, :])[0, 0]          # (Cin,Cout)
    bias_total = bias3 + bias1                                # (Cout,)

    out = jax.block_until_ready(
        rep_block_3x3_pallas(x, w3_folded, w1_folded, bias_total))
    assert out.shape == (N, Cout, H, W)

    # Tight check: identical bf16-rounded operands, independent XLA convolution.
    w_comb_b = (w3_folded.at[1, 1].add(w1_folded)
                ).astype(jnp.bfloat16).astype(jnp.float32)
    x_b = x.astype(jnp.bfloat16).astype(jnp.float32)
    ref_tight = _conv3x3_reference(x_b, w_comb_b, bias_total)
    np.testing.assert_allclose(np.asarray(out), np.asarray(ref_tight),
                               rtol=1e-3, atol=1e-3)

    # Loose check against the unmodified two-branch f32 module semantics
    # (difference is only the bf16 rounding of the matmul operands).
    ref_full = _reference(x, w3_folded, w1_folded, bias_total)
    np.testing.assert_allclose(np.asarray(out), np.asarray(ref_full),
                               rtol=5e-2, atol=5e-2)

    print("KERNEL_OK")
</pallas_src>

<mosaic_0001>
module attributes {stable_mosaic.version = 11 : i64} {
  func.func @_repblock_kernel(%arg0: i32, %arg1: memref<1x16x16x4xbf16, #tpu.memory_space<vmem>>, %arg2: memref<36x8xbf16, #tpu.memory_space<vmem>>, %arg3: memref<1x8xf32, #tpu.memory_space<vmem>>, %arg4: memref<1x256x8xf32, #tpu.memory_space<vmem>>, %arg5: memref<18x18x4xbf16, #tpu.memory_space<vmem>>) attributes {dimension_semantics = [#tpu.dimension_semantics<parallel>], iteration_bounds = array<i64: 2>, scalar_prefetch = 0 : i64, scratch_operands = 1 : i64, tpu.core_type = #tpu.core_type<tc>, window_params = [{transform_indices = @transform_0, window_bounds = array<i64: 1, 16, 16, 4>}, {pipeline_mode = #tpu.pipeline_mode<synchronous>, transform_indices = @transform_1, window_bounds = array<i64: 36, 8>}, {pipeline_mode = #tpu.pipeline_mode<synchronous>, transform_indices = @transform_2, window_bounds = array<i64: 1, 8>}, {transform_indices = @transform_3, window_bounds = array<i64: 1, 256, 8>}]} {
    %cst = arith.constant 0.000000e+00 : bf16
    %0 = vector.broadcast %cst : bf16 to vector<18x18x4xbf16>
    %c0 = arith.constant 0 : index
    %c0_0 = arith.constant 0 : index
    %c0_1 = arith.constant 0 : index
    %1 = vector.load %arg5[%c0, %c0_0, %c0_1] : memref<18x18x4xbf16, #tpu.memory_space<vmem>>, vector<18x18x4xbf16>
    tpu.vector_store %arg5[%c0, %c0_0, %c0_1], %0 {strides = array<i32>} : memref<18x18x4xbf16, #tpu.memory_space<vmem>>, vector<18x18x4xbf16>,
    %c0_2 = arith.constant 0 : index
    %c0_3 = arith.constant 0 : index
    %c0_4 = arith.constant 0 : index
    %c0_5 = arith.constant 0 : index
    %2 = vector.load %arg1[%c0_2, %c0_3, %c0_4, %c0_5] : memref<1x16x16x4xbf16, #tpu.memory_space<vmem>>, vector<1x16x16x4xbf16>
    %3 = vector.shape_cast %2 : vector<1x16x16x4xbf16> to vector<16x16x4xbf16>
    %c1 = arith.constant 1 : index
    %c1_6 = arith.constant 1 : index
    %c0_7 = arith.constant 0 : index
    %4 = vector.load %arg5[%c1, %c1_6, %c0_7] : memref<18x18x4xbf16, #tpu.memory_space<vmem>>, vector<16x16x4xbf16>
    tpu.vector_store %arg5[%c1, %c1_6, %c0_7], %3 {strides = array<i32>} : memref<18x18x4xbf16, #tpu.memory_space<vmem>>, vector<16x16x4xbf16>,
    %c0_8 = arith.constant 0 : index
    %c0_9 = arith.constant 0 : index
    %c0_10 = arith.constant 0 : index
    %5 = vector.load %arg5[%c0_8, %c0_9, %c0_10] : memref<18x18x4xbf16, #tpu.memory_space<vmem>>, vector<16x16x4xbf16>
    %c0_11 = arith.constant 0 : index
    %c1_12 = arith.constant 1 : index
    %c0_13 = arith.constant 0 : index
    %6 = vector.load %arg5[%c0_11, %c1_12, %c0_13] : memref<18x18x4xbf16, #tpu.memory_space<vmem>>, vector<16x16x4xbf16>
    %c0_14 = arith.constant 0 : index
    %c2 = arith.constant 2 : index
    %c0_15 = arith.constant 0 : index
    %7 = vector.load %arg5[%c0_14, %c2, %c0_15] : memref<18x18x4xbf16, #tpu.memory_space<vmem>>, vector<16x16x4xbf16>
    %c1_16 = arith.constant 1 : index
    %c0_17 = arith.constant 0 : index
    %c0_18 = arith.constant 0 : index
    %8 = vector.load %arg5[%c1_16, %c0_17, %c0_18] : memref<18x18x4xbf16, #tpu.memory_space<vmem>>, vector<16x16x4xbf16>
    %c1_19 = arith.constant 1 : index
    %c1_20 = arith.constant 1 : index
    %c0_21 = arith.constant 0 : index
    %9 = vector.load %arg5[%c1_19, %c1_20, %c0_21] : memref<18x18x4xbf16, #tpu.memory_space<vmem>>, vector<16x16x4xbf16>
    %c1_22 = arith.constant 1 : index
    %c2_23 = arith.constant 2 : index
    %c0_24 = arith.constant 0 : index
    %10 = vector.load %arg5[%c1_22, %c2_23, %c0_24] : memref<18x18x4xbf16, #tpu.memory_space<vmem>>, vector<16x16x4xbf16>
    %c2_25 = arith.constant 2 : index
    %c0_26 = arith.constant 0 : index
    %c0_27 = arith.constant 0 : index
    %11 = vector.load %arg5[%c2_25, %c0_26, %c0_27] : memref<18x18x4xbf16, #tpu.memory_space<vmem>>, vector<16x16x4xbf16>
    %c2_28 = arith.constant 2 : index
    %c1_29 = arith.constant 1 : index
    %c0_30 = arith.constant 0 : index
    %12 = vector.load %arg5[%c2_28, %c1_29, %c0_30] : memref<18x18x4xbf16, #tpu.memory_space<vmem>>, vector<16x16x4xbf16>
    %c2_31 = arith.constant 2 : index
    %c2_32 = arith.constant 2 : index
    %c0_33 = arith.constant 0 : index
    %13 = vector.load %arg5[%c2_31, %c2_32, %c0_33] : memref<18x18x4xbf16, #tpu.memory_space<vmem>>, vector<16x16x4xbf16>
    %14 = tpu.concatenate %5, %6, %7, %8, %9, %10, %11, %12, %13 in 2 : vector<16x16x4xbf16>, vector<16x16x4xbf16>, vector<16x16x4xbf16>, vector<16x16x4xbf16>, vector<16x16x4xbf16>, vector<16x16x4xbf16>, vector<16x16x4xbf16>, vector<16x16x4xbf16>, vector<16x16x4xbf16> -> vector<16x16x36xbf16>
    %15 = vector.shape_cast %14 : vector<16x16x36xbf16> to vector<256x36xbf16>
    %c0_34 = arith.constant 0 : index
    %c0_35 = arith.constant 0 : index
    %16 = vector.load %arg2[%c0_34, %c0_35] : memref<36x8xbf16, #tpu.memory_space<vmem>>, vector<36x8xbf16>
    %cst_36 = arith.constant dense<0.000000e+00> : vector<256x8xf32>
    %17 = tpu.matmul %15, %16, %cst_36 {dimension_numbers = #tpu.dot_dimension_numbers<[1], [0], [0], [1], [0, 0, 1, 1], [], []>} : vector<256x36xbf16>, vector<36x8xbf16>, vector<256x8xf32> -> vector<256x8xf32>
    %c0_37 = arith.constant 0 : index
    %c0_38 = arith.constant 0 : index
    %18 = vector.load %arg3[%c0_37, %c0_38] : memref<1x8xf32, #tpu.memory_space<vmem>>, vector<1x8xf32>
    %19 = vector.broadcast %18 : vector<1x8xf32> to vector<256x8xf32>
    %20 = arith.addf %17, %19 : vector<256x8xf32>
    %cst_39 = arith.constant 0.000000e+00 : f32
    %21 = vector.broadcast %cst_39 : f32 to vector<256x8xf32>
    %22 = arith.maximumf %20, %21 : vector<256x8xf32>
    %c0_40 = arith.constant 0 : index
    %c0_41 = arith.constant 0 : index
    %c0_42 = arith.constant 0 : index
    %23 = vector.load %arg4[%c0_40, %c0_41, %c0_42] : memref<1x256x8xf32, #tpu.memory_space<vmem>>, vector<1x256x8xf32>
    %24 = vector.shape_cast %23 : vector<1x256x8xf32> to vector<256x8xf32>
    %25 = vector.shape_cast %22 : vector<256x8xf32> to vector<1x256x8xf32>
    tpu.vector_store %arg4[%c0_40, %c0_41, %c0_42], %25 {strides = array<i32>} : memref<1x256x8xf32, #tpu.memory_space<vmem>>, vector<1x256x8xf32>,
    return
  }
  func.func @transform_0(%arg0: i32) -> (i32, i32, i32, i32) {
    %c0_i32 = arith.constant 0 : i32
    %c0_i32_0 = arith.constant 0 : i32
    %c0_i32_1 = arith.constant 0 : i32
    %c0_i32_2 = arith.constant 0 : i32
    return %arg0, %c0_i32, %c0_i32_0, %c0_i32_1 : i32, i32, i32, i32
  }
  func.func @transform_1(%arg0: i32) -> (i32, i32) {
    %c0_i32 = arith.constant 0 : i32
    %c0_i32_0 = arith.constant 0 : i32
    %c0_i32_1 = arith.constant 0 : i32
    return %c0_i32, %c0_i32_0 : i32, i32
  }
  func.func @transform_2(%arg0: i32) -> (i32, i32) {
    %c0_i32 = arith.constant 0 : i32
    %c0_i32_0 = arith.constant 0 : i32
    %c0_i32_1 = arith.constant 0 : i32
    return %c0_i32, %c0_i32_0 : i32, i32
  }
  func.func @transform_3(%arg0: i32) -> (i32, i32, i32) {
    %c0_i32 = arith.constant 0 : i32
    %c0_i32_0 = arith.constant 0 : i32
    %c0_i32_1 = arith.constant 0 : i32
    return %arg0, %c0_i32, %c0_i32_0 : i32, i32, i32
  }
}

</mosaic_0001>

<llo_original>
// kernel: tpu_custom_call.1
$region0: #{tpu_custom_call.1}
  #allocation0 [shape = 'u32[]', space=smem, size = 0x4, offset = 0x4, fixed_abs, tag = 'smem constant byte address 0x4 - core index']
  #allocation1 [shape = 'u32[144,128]{1,0:T(1,128)}', space=vmem, size = 0x12000, scoped, tag = 'internal scratch']
  #allocation2 [shape = 'bf16[18,18,4]{2,1,0:T(8,128)(2,1)}', space=vmem, size = 0x1b000, scoped, tag = 'scratch operand']
  %s0 = inlined_call_operand.vmem [shape: bf16[2,16,16,4], index: 0, kind: input, shape index: {}]
  %s1 = inlined_call_operand.vmem [shape: bf16[36,8], index: 1, kind: input, shape index: {}]
  %s2 = inlined_call_operand.vmem [shape: f32[1,8], index: 2, kind: input, shape index: {}]
  %s3 = inlined_call_operand.vmem [shape: f32[2,256,8], index: 3, kind: output, shape index: {}]
  %s4 = sld [smem:[#allocation0]]
  $region45: #{tpu_custom_call.1} parent=0
    _
  %s6 = ssub.s32 1, %s4
  %s7 = scalar_select 0, %s6, %s4
  loop: start=0, step=1, limit=4
  $region2: #{tpu_custom_call.1} parent=0 // loop_pre_header
    _
  $region3: #{tpu_custom_call.1} parent=0 // loop_header
    %s9 = sphi 0, %s13
    %p10 = scmp.ge.s32.totalorder %s9, 4
    %s19 = sphi 0, %s21
    %s22 = sphi 0, %s19
    %s23 = sphi 0, %s22
    %s39 = sphi 0, %s23
    %s43 = sphi 0, %s43
    %s45 = sphi 0, %s43
    %s46 = sphi 0, %s45
    %s60 = sphi 0, %s46
    %s64 = sphi 0, %s64
    %s66 = sphi 0, %s64
    %s67 = sphi 0, %s66
    %s81 = sphi 0, %s67
    %s87 = sphi 0, %s89
    %s90 = sphi 0, %s87
    %s91 = sphi 0, %s90
    %s107 = sphi 0, %s91
  $region4: #{tpu_custom_call.1} parent=0 // loop_header_branch
    %12 = sbr.rel (%p10) target = $region8
  $region5: #{tpu_custom_call.1} parent=0 // loop_body
    %s14 = ssub.s32 %s9, 1
    %s15 = ssub.s32 %s9, 2
    %s16 = sadd.s32 %s9, 1
    %s17 = ssub.s32 %s9, %s16
    %p18 = scmp.eq.s32.totalorder %s17, 0
    %s20 = sadd.s32 %s19, 1
    %s21 = scalar_select %p18, %s19, %s20
    %p24 = pneg %p18
    %p25 = scmp.eq.s32.totalorder %s9, 1
    %p26 = por %p24, %p25
    %p27 = scmp.ne.s32.totalorder %s19, %s22
    %p28 = scmp.eq.s32.totalorder %s9, 0
    %p29 = por %p27, %p28
    %p30 = scmp.ne.s32.totalorder %s19, %s22
    %p31 = scmp.eq.s32.totalorder %s14, 1
    %p32 = por %p30, %p31
    %p33 = scmp.ne.s32.totalorder %s22, %s23
    %p34 = scmp.eq.s32.totalorder %s14, 0
    %p35 = por %p33, %p34
    %p36 = scmp.ne.s32.totalorder %s22, %s23
    %p37 = scmp.eq.s32.totalorder %s15, 1
    %p38 = por %p36, %p37
    %p40 = scmp.ne.s32.totalorder %s23, %s39
    %p41 = scmp.eq.s32.totalorder %s15, 0
    %p42 = por %p40, %p41
    %s44 = sadd.s32 %s43, 1
    %p47 = scmp.eq.s32.totalorder %s9, 1
    %p48 = scmp.ne.s32.totalorder %s43, %s45
    %p49 = scmp.eq.s32.totalorder %s9, 0
    %p50 = por %p48, %p49
    %p51 = scmp.ne.s32.totalorder %s43, %s45
    %p52 = scmp.eq.s32.totalorder %s14, 1
    %p53 = por %p51, %p52
    %p54 = scmp.ne.s32.totalorder %s45, %s46
    %p55 = scmp.eq.s32.totalorder %s14, 0
    %p56 = por %p54, %p55
    %p57 = scmp.ne.s32.totalorder %s45, %s46
    %p58 = scmp.eq.s32.totalorder %s15, 1
    %p59 = por %p57, %p58
    %p61 = scmp.ne.s32.totalorder %s46, %s60
    %p62 = scmp.eq.s32.totalorder %s15, 0
    %p63 = por %p61, %p62
    %s65 = sadd.s32 %s64, 1
    %p68 = scmp.eq.s32.totalorder %s9, 1
    %p69 = scmp.ne.s32.totalorder %s64, %s66
    %p70 = scmp.eq.s32.totalorder %s9, 0
    %p71 = por %p69, %p70
    %p72 = scmp.ne.s32.totalorder %s64, %s66
    %p73 = scmp.eq.s32.totalorder %s14, 1
    %p74 = por %p72, %p73
    %p75 = scmp.ne.s32.totalorder %s66, %s67
    %p76 = scmp.eq.s32.totalorder %s14, 0
    %p77 = por %p75, %p76
    %p78 = scmp.ne.s32.totalorder %s66, %s67
    %p79 = scmp.eq.s32.totalorder %s15, 1
    %p80 = por %p78, %p79
    %p82 = scmp.ne.s32.totalorder %s67, %s81
    %p83 = scmp.eq.s32.totalorder %s15, 0
    %p84 = por %p82, %p83
    %s85 = ssub.s32 %s9, %s16
    %p86 = scmp.eq.s32.totalorder %s85, 0
    %s88 = sadd.s32 %s87, 1
    %s89 = scalar_select %p86, %s87, %s88
    %p92 = pneg %p86
    %p93 = scmp.eq.s32.totalorder %s9, 1
    %p94 = por %p92, %p93
    %p95 = scmp.ne.s32.totalorder %s87, %s90
    %p96 = scmp.eq.s32.totalorder %s9, 0
    %p97 = por %p95, %p96
    %p98 = scmp.ne.s32.totalorder %s87, %s90
    %p99 = scmp.eq.s32.totalorder %s14, 1
    %p100 = por %p98, %p99
    %p101 = scmp.ne.s32.totalorder %s90, %s91
    %p102 = scmp.eq.s32.totalorder %s14, 0
    %p103 = por %p101, %p102
    %p104 = scmp.ne.s32.totalorder %s90, %s91
    %p105 = scmp.eq.s32.totalorder %s15, 1
    %p106 = por %p104, %p105
    %p108 = scmp.ne.s32.totalorder %s91, %s107
    %p109 = scmp.eq.s32.totalorder %s15, 0
    %p110 = por %p108, %p109
    %p111 = scmp.le.s32.totalorder 1, %s9
    %p112 = scmp.lt.s32.totalorder %s9, 3
    %p113 = pnand %p111, %p112
    %p114 = pneg %p113
    // Predicated region
    $region9: #{tpu_custom_call.1} parent=5 // pred_check
      _
    $region10: #{tpu_custom_call.1} parent=5 // pred_check_branch
      %116 = sbr.rel (%p113) target = $region12
    $region11: #{tpu_custom_call.1} parent=5 // pred_region
      %s117 = ssub.s32 %s9, 1
      // Predicated region
      $region13: #{tpu_custom_call.1} parent=11 // pred_check
        %p118 = pneg %p56
      $region14: #{tpu_custom_call.1} parent=11 // pred_check_branch
        %120 = sbr.rel (%p118) target = $region16
      $region15: #{tpu_custom_call.1} parent=11 // pred_region
        _
      $region16: #{tpu_custom_call.1} parent=11 // pred_fallthru
        _
      // Predicated region
      $region17: #{tpu_custom_call.1} parent=11 // pred_check
        %p121 = pneg %p77
      $region18: #{tpu_custom_call.1} parent=11 // pred_check_branch
        %123 = sbr.rel (%p121) target = $region20
      $region19: #{tpu_custom_call.1} parent=11 // pred_region
        _
      $region20: #{tpu_custom_call.1} parent=11 // pred_fallthru
        _
    $region12: #{tpu_custom_call.1} parent=5 // pred_fallthru
      _
    %p124 = scmp.lt.s32.totalorder %s9, 2
    // Predicated region
    $region21: #{tpu_custom_call.1} parent=5 // pred_check
      %p125 = pneg %p124
    $region22: #{tpu_custom_call.1} parent=5 // pred_check_branch
      %127 = sbr.rel (%p125) target = $region24
    $region23: #{tpu_custom_call.1} parent=5 // pred_region
      // Predicated region
      $region25: #{tpu_custom_call.1} parent=23 // pred_check
        %p128 = pneg %p29
      $region26: #{tpu_custom_call.1} parent=23 // pred_check_branch
        %130 = sbr.rel (%p128) target = $region28
      $region27: #{tpu_custom_call.1} parent=23 // pred_region
        %p131 = scmp.lt.s32.totalorder %s9, 1
        %s132 = scalar_select %p131, %s9, 1
        %s133 = smul.addr %s132, 32
        %s134 = smul.addr %s133, 4
        %s135 = scalar_lea.vmem %s0, %s134
      $region28: #{tpu_custom_call.1} parent=23 // pred_fallthru
        _
    $region24: #{tpu_custom_call.1} parent=5 // pred_fallthru
      _
    %p136 = scmp.le.s32.totalorder 1, %s9
    %p137 = scmp.lt.s32.totalorder %s9, 3
    %p138 = pnand %p136, %p137
    %p139 = pneg %p138
    // Predicated region
    $region29: #{tpu_custom_call.1} parent=5 // pred_check
      _
    $region30: #{tpu_custom_call.1} parent=5 // pred_check_branch
      %141 = sbr.rel (%p138) target = $region32
    $region31: #{tpu_custom_call.1} parent=5 // pred_region
      %s142 = ssub.s32 %s9, 1
      %p143 = scmp.lt.s32.totalorder %s14, 1
      %s144 = scalar_select %p143, %s14, 1
      %s145 = smul.addr %s144, 32
      %s146 = smul.addr %s145, 4
      %s147 = scalar_lea.vmem %s0, %s146
      %p148 = pneg %p35
      %p149 = pneg %p32
      %p150 = pneg %p56
      %p151 = pneg %p53
      %p152 = pneg %p77
      %p153 = pneg %p74
      %p154 = pneg %p103
      %p155 = pneg %p100
      %p156 = scmp.lt.s32.totalorder %s14, 1
      %s157 = scalar_select %p156, %s14, 1
      %s158 = smul.addr %s157, 32
      %s159 = smul.addr %s158, 8
      %s160 = scalar_lea.vmem %s3, %s159
      %p161 = scmp.lt.s32.totalorder %s14, 1
      %s162 = scalar_select %p161, %s14, 1
      %s163 = smul.addr %s162, 32
      %s164 = smul.addr %s163, 4
      %s165 = scalar_lea.vmem %s0, %s164
      %p166 = scmp.lt.s32.totalorder %s14, 1
      %s167 = scalar_select %p166, %s14, 1
      %s168 = smul.addr %s167, 32
      %s169 = smul.addr %s168, 8
      %s170 = scalar_lea.vmem %s3, %s169
      %vm172 = vcmask 27648
      %173 = vst.msk [vmem:[#allocation2] sm:$0xf] %vm172, 0
      %174 = vst.msk [vmem:[#allocation2 + $0x4] sm:$0xf] %vm172, 0
      %vm175 = vcmask 24576
      %176 = vst.msk [vmem:[#allocation2 + $0x8] sm:$0x1] %vm175, 0
      %177 = vst.msk [vmem:[#allocation2 + $0xc] sm:$0xf] %vm172, 0
      %178 = vst.msk [vmem:[#allocation2 + $0x10] sm:$0xf] %vm172, 0
      %179 = vst.msk [vmem:[#allocation2 + $0x14] sm:$0x1] %vm175, 0
      %180 = vst.msk [vmem:[#allocation2 + $0x18] sm:$0xf] %vm172, 0
      %181 = vst.msk [vmem:[#allocation2 + $0x1c] sm:$0xf] %vm172, 0
      %182 = vst.msk [vmem:[#allocation2 + $0x20] sm:$0x1] %vm175, 0
      %183 = vst.msk [vmem:[#allocation2 + $0x24] sm:$0xf] %vm172, 0
      %184 = vst.msk [vmem:[#allocation2 + $0x28] sm:$0xf] %vm172, 0
      %185 = vst.msk [vmem:[#allocation2 + $0x2c] sm:$0x1] %vm175, 0
      %186 = vst.msk [vmem:[#allocation2 + $0x30] sm:$0xf] %vm172, 0
      %187 = vst.msk [vmem:[#allocation2 + $0x34] sm:$0xf] %vm172, 0
      %188 = vst.msk [vmem:[#allocation2 + $0x38] sm:$0x1] %vm175, 0
      %189 = vst.msk [vmem:[#allocation2 + $0x3c] sm:$0xf] %vm172, 0
      %190 = vst.msk [vmem:[#allocation2 + $0x40] sm:$0xf] %vm172, 0
      %191 = vst.msk [vmem:[#allocation2 + $0x44] sm:$0x1] %vm175, 0
      %192 = vst.msk [vmem:[#allocation2 + $0x48] sm:$0xf] %vm172, 0
      %193 = vst.msk [vmem:[#allocation2 + $0x4c] sm:$0xf] %vm172, 0
      %194 = vst.msk [vmem:[#allocation2 + $0x50] sm:$0x1] %vm175, 0
      %195 = vst.msk [vmem:[#allocation2 + $0x54] sm:$0xf] %vm172, 0
      %196 = vst.msk [vmem:[#allocation2 + $0x58] sm:$0xf] %vm172, 0
      %197 = vst.msk [vmem:[#allocation2 + $0x5c] sm:$0x1] %vm175, 0
      %198 = vst.msk [vmem:[#allocation2 + $0x60] sm:$0xf] %vm172, 0
      %199 = vst.msk [vmem:[#allocation2 + $0x64] sm:$0xf] %vm172, 0
      %200 = vst.msk [vmem:[#allocation2 + $0x68] sm:$0x1] %vm175, 0
      %201 = vst.msk [vmem:[#allocation2 + $0x6c] sm:$0xf] %vm172, 0
      %202 = vst.msk [vmem:[#allocation2 + $0x70] sm:$0xf] %vm172, 0
      %203 = vst.msk [vmem:[#allocation2 + $0x74] sm:$0x1] %vm175, 0
      %204 = vst.msk [vmem:[#allocation2 + $0x78] sm:$0xf] %vm172, 0
      %205 = vst.msk [vmem:[#allocation2 + $0x7c] sm:$0xf] %vm172, 0
      %206 = vst.msk [vmem:[#allocation2 + $0x80] sm:$0x1] %vm175, 0
      %207 = vst.msk [vmem:[#allocation2 + $0x84] sm:$0xf] %vm172, 0
      %208 = vst.msk [vmem:[#allocation2 + $0x88] sm:$0xf] %vm172, 0
      %209 = vst.msk [vmem:[#allocation2 + $0x8c] sm:$0x1] %vm175, 0
      %210 = vst.msk [vmem:[#allocation2 + $0x90] sm:$0xf] %vm172, 0
      %211 = vst.msk [vmem:[#allocation2 + $0x94] sm:$0xf] %vm172, 0
      %212 = vst.msk [vmem:[#allocation2 + $0x98] sm:$0x1] %vm175, 0
      %213 = vst.msk [vmem:[#allocation2 + $0x9c] sm:$0xf] %vm172, 0
      %214 = vst.msk [vmem:[#allocation2 + $0xa0] sm:$0xf] %vm172, 0
      %215 = vst.msk [vmem:[#allocation2 + $0xa4] sm:$0x1] %vm175, 0
      %216 = vst.msk [vmem:[#allocation2 + $0xa8] sm:$0xf] %vm172, 0
      %217 = vst.msk [vmem:[#allocation2 + $0xac] sm:$0xf] %vm172, 0
      %218 = vst.msk [vmem:[#allocation2 + $0xb0] sm:$0x1] %vm175, 0
      %219 = vst.msk [vmem:[#allocation2 + $0xb4] sm:$0xf] %vm172, 0
      %220 = vst.msk [vmem:[#allocation2 + $0xb8] sm:$0xf] %vm172, 0
      %221 = vst.msk [vmem:[#allocation2 + $0xbc] sm:$0x1] %vm175, 0
      %222 = vst.msk [vmem:[#allocation2 + $0xc0] sm:$0xf] %vm172, 0
      %223 = vst.msk [vmem:[#allocation2 + $0xc4] sm:$0xf] %vm172, 0
      %224 = vst.msk [vmem:[#allocation2 + $0xc8] sm:$0x1] %vm175, 0
      %225 = vst.msk [vmem:[#allocation2 + $0xcc] sm:$0xf] %vm172, 0
      %226 = vst.msk [vmem:[#allocation2 + $0xd0] sm:$0xf] %vm172, 0
      %227 = vst.msk [vmem:[#allocation2 + $0xd4] sm:$0x1] %vm175, 0
      %v228 = vld [vmem:[%s165] sm:$0xf]
      %v229 = vld [vmem:[%s165 + $0x4] sm:$0xf]
      %v230 = vld [vmem:[%s165 + $0x8] sm:$0xf]
      %v231 = vld [vmem:[%s165 + $0xc] sm:$0xf]
      %v232 = vld [vmem:[%s165 + $0x10] sm:$0xf]
      %v233 = vld [vmem:[%s165 + $0x14] sm:$0xf]
      %v234 = vld [vmem:[%s165 + $0x18] sm:$0xf]
      %v235 = vld [vmem:[%s165 + $0x1c] sm:$0xf]
      %v236 = vld [vmem:[%s165 + $0x20] sm:$0xf]
      %v237 = vld [vmem:[%s165 + $0x24] sm:$0xf]
      %v238 = vld [vmem:[%s165 + $0x28] sm:$0xf]
      %v239 = vld [vmem:[%s165 + $0x2c] sm:$0xf]
      %v240 = vld [vmem:[%s165 + $0x30] sm:$0xf]
      %v241 = vld [vmem:[%s165 + $0x34] sm:$0xf]
      %v242 = vld [vmem:[%s165 + $0x38] sm:$0xf]
      %v243 = vld [vmem:[%s165 + $0x3c] sm:$0xf]
      %v244 = vld [vmem:[%s165 + $0x40] sm:$0xf]
      %v245 = vld [vmem:[%s165 + $0x44] sm:$0xf]
      %v246 = vld [vmem:[%s165 + $0x48] sm:$0xf]
      %v247 = vld [vmem:[%s165 + $0x4c] sm:$0xf]
      %v248 = vld [vmem:[%s165 + $0x50] sm:$0xf]
      %v249 = vld [vmem:[%s165 + $0x54] sm:$0xf]
      %v250 = vld [vmem:[%s165 + $0x58] sm:$0xf]
      %v251 = vld [vmem:[%s165 + $0x5c] sm:$0xf]
      %v252 = vld [vmem:[%s165 + $0x60] sm:$0xf]
      %v253 = vld [vmem:[%s165 + $0x64] sm:$0xf]
      %v254 = vld [vmem:[%s165 + $0x68] sm:$0xf]
      %v255 = vld [vmem:[%s165 + $0x6c] sm:$0xf]
      %v256 = vld [vmem:[%s165 + $0x70] sm:$0xf]
      %v257 = vld [vmem:[%s165 + $0x74] sm:$0xf]
      %v258 = vld [vmem:[%s165 + $0x78] sm:$0xf]
      %v259 = vld [vmem:[%s165 + $0x7c] sm:$0xf]
      %vm260 = vsmask.f32 256
      %vm261 = vsmask.f32 4368
      %vm262 = vmor %vm260, %vm261
      %v264 = vshrl.u32 %v228, 16
      %v266 = vrot.slane %v264, 7
      %v267 = vshll.u32 %v228, 16
      %v269 = vor.u32 %v266, %v267
      %v270 = vrot.slane %v266, 4
      %v272 = vshrl.u32 %v229, 16
      %v274 = vrot.slane %v272, 7
      %v275 = vshll.u32 %v229, 16
      %v277 = vor.u32 %v274, %v275
      %v278 = vsel %vm262, %v270, %v277
      %v279 = vrot.slane %v274, 4
      %v281 = vshrl.u32 %v230, 16
      %v283 = vrot.slane %v281, 7
      %v284 = vshll.u32 %v230, 16
      %v286 = vor.u32 %v283, %v284
      %v287 = vrot.slane %v283, 4
      %v289 = vshrl.u32 %v231, 16
      %v291 = vrot.slane %v289, 7
      %v292 = vshll.u32 %v231, 16
      %v294 = vor.u32 %v291, %v292
      %v295 = vsel %vm262, %v287, %v294
      %v296 = vrot.slane %v291, 4
      %v298 = vshrl.u32 %v232, 16
      %v300 = vrot.slane %v298, 7
      %v301 = vshll.u32 %v232, 16
      %v303 = vor.u32 %v300, %v301
      %v304 = vrot.slane %v300, 4
      %v306 = vshrl.u32 %v233, 16
      %v308 = vrot.slane %v306, 7
      %v309 = vshll.u32 %v233, 16
      %v311 = vor.u32 %v308, %v309
      %v312 = vsel %vm262, %v304, %v311
      %v313 = vrot.slane %v308, 4
      %v315 = vshrl.u32 %v234, 16
      %v317 = vrot.slane %v315, 7
      %v318 = vshll.u32 %v234, 16
      %v320 = vor.u32 %v317, %v318
      %v321 = vrot.slane %v317, 4
      %v323 = vshrl.u32 %v235, 16
      %v325 = vrot.slane %v323, 7
      %v326 = vshll.u32 %v235, 16
      %v328 = vor.u32 %v325, %v326
      %v329 = vsel %vm262, %v321, %v328
      %v330 = vrot.slane %v325, 4
      %v332 = vshrl.u32 %v236, 16
      %v334 = vrot.slane %v332, 7
      %v335 = vshll.u32 %v236, 16
      %v337 = vor.u32 %v334, %v335
      %v338 = vrot.slane %v334, 4
      %v340 = vshrl.u32 %v237, 16
      %v342 = vrot.slane %v340, 7
      %v343 = vshll.u32 %v237, 16
      %v345 = vor.u32 %v342, %v343
      %v346 = vsel %vm262, %v338, %v345
      %v347 = vrot.slane %v342, 4
      %v349 = vshrl.u32 %v238, 16
      %v351 = vrot.slane %v349, 7
      %v352 = vshll.u32 %v238, 16
      %v354 = vor.u32 %v351, %v352
      %v355 = vrot.slane %v351, 4
      %v357 = vshrl.u32 %v239, 16
      %v359 = vrot.slane %v357, 7
      %v360 = vshll.u32 %v239, 16
      %v362 = vor.u32 %v359, %v360
      %v363 = vsel %vm262, %v355, %v362
      %v364 = vrot.slane %v359, 4
      %v366 = vshrl.u32 %v240, 16
      %v368 = vrot.slane %v366, 7
      %v369 = vshll.u32 %v240, 16
      %v371 = vor.u32 %v368, %v369
      %v372 = vrot.slane %v368, 4
      %v374 = vshrl.u32 %v241, 16
      %v376 = vrot.slane %v374, 7
      %v377 = vshll.u32 %v241, 16
      %v379 = vor.u32 %v376, %v377
      %v380 = vsel %vm262, %v372, %v379
      %v381 = vrot.slane %v376, 4
      %v383 = vshrl.u32 %v242, 16
      %v385 = vrot.slane %v383, 7
      %v386 = vshll.u32 %v242, 16
      %v388 = vor.u32 %v385, %v386
      %v389 = vrot.slane %v385, 4
      %v391 = vshrl.u32 %v243, 16
      %v393 = vrot.slane %v391, 7
      %v394 = vshll.u32 %v243, 16
      %v396 = vor.u32 %v393, %v394
      %v397 = vsel %vm262, %v389, %v396
      %v398 = vrot.slane %v393, 4
      %v400 = vshrl.u32 %v244, 16
      %v402 = vrot.slane %v400, 7
      %v403 = vshll.u32 %v244, 16
      %v405 = vor.u32 %v402, %v403
      %v406 = vrot.slane %v402, 4
      %v408 = vshrl.u32 %v245, 16
      %v410 = vrot.slane %v408, 7
      %v411 = vshll.u32 %v245, 16
      %v413 = vor.u32 %v410, %v411
      %v414 = vsel %vm262, %v406, %v413
      %v415 = vrot.slane %v410, 4
      %v417 = vshrl.u32 %v246, 16
      %v419 = vrot.slane %v417, 7
      %v420 = vshll.u32 %v246, 16
      %v422 = vor.u32 %v419, %v420
      %v423 = vrot.slane %v419, 4
      %v425 = vshrl.u32 %v247, 16
      %v427 = vrot.slane %v425, 7
      %v428 = vshll.u32 %v247, 16
      %v430 = vor.u32 %v427, %v428
      %v431 = vsel %vm262, %v423, %v430
      %v432 = vrot.slane %v427, 4
      %v434 = vshrl.u32 %v248, 16
      %v436 = vrot.slane %v434, 7
      %v437 = vshll.u32 %v248, 16
      %v439 = vor.u32 %v436, %v437
      %v440 = vrot.slane %v436, 4
      %v442 = vshrl.u32 %v249, 16
      %v444 = vrot.slane %v442, 7
      %v445 = vshll.u32 %v249, 16
      %v447 = vor.u32 %v444, %v445
      %v448 = vsel %vm262, %v440, %v447
      %v449 = vrot.slane %v444, 4
      %v451 = vshrl.u32 %v250, 16
      %v453 = vrot.slane %v451, 7
      %v454 = vshll.u32 %v250, 16
      %v456 = vor.u32 %v453, %v454
      %v457 = vrot.slane %v453, 4
      %v459 = vshrl.u32 %v251, 16
      %v461 = vrot.slane %v459, 7
      %v462 = vshll.u32 %v251, 16
      %v464 = vor.u32 %v461, %v462
      %v465 = vsel %vm262, %v457, %v464
      %v466 = vrot.slane %v461, 4
      %v468 = vshrl.u32 %v252, 16
      %v470 = vrot.slane %v468, 7
      %v471 = vshll.u32 %v252, 16
      %v473 = vor.u32 %v470, %v471
      %v474 = vrot.slane %v470, 4
      %v476 = vshrl.u32 %v253, 16
      %v478 = vrot.slane %v476, 7
      %v479 = vshll.u32 %v253, 16
      %v481 = vor.u32 %v478, %v479
      %v482 = vsel %vm262, %v474, %v481
      %v483 = vrot.slane %v478, 4
      %v485 = vshrl.u32 %v254, 16
      %v487 = vrot.slane %v485, 7
      %v488 = vshll.u32 %v254, 16
      %v490 = vor.u32 %v487, %v488
      %v491 = vrot.slane %v487, 4
      %v493 = vshrl.u32 %v255, 16
      %v495 = vrot.slane %v493, 7
      %v496 = vshll.u32 %v255, 16
      %v498 = vor.u32 %v495, %v496
      %v499 = vsel %vm262, %v491, %v498
      %v500 = vrot.slane %v495, 4
      %v502 = vshrl.u32 %v256, 16
      %v504 = vrot.slane %v502, 7
      %v505 = vshll.u32 %v256, 16
      %v507 = vor.u32 %v504, %v505
      %v508 = vrot.slane %v504, 4
      %v510 = vshrl.u32 %v257, 16
      %v512 = vrot.slane %v510, 7
      %v513 = vshll.u32 %v257, 16
      %v515 = vor.u32 %v512, %v513
      %v516 = vsel %vm262, %v508, %v515
      %v517 = vrot.slane %v512, 4
      %v519 = vshrl.u32 %v258, 16
      %v521 = vrot.slane %v519, 7
      %v522 = vshll.u32 %v258, 16
      %v524 = vor.u32 %v521, %v522
      %v525 = vrot.slane %v521, 4
      %v527 = vshrl.u32 %v259, 16
      %v529 = vrot.slane %v527, 7
      %v530 = vshll.u32 %v259, 16
      %v532 = vor.u32 %v529, %v530
      %v533 = vsel %vm262, %v525, %v532
      %v534 = vrot.slane %v529, 4
      %s583 = scalar_lea.vmem [#allocation2], 12
      %vm584 = vcmask 27648
      %vm585 = vsmask.f32 7938
      %vm586 = vmand %vm584, %vm585
      %v587 = vld [vmem:[%s583] sm:$0xf]
      %v588 = vsel %vm586, %v269, %v587
      %589 = vst [vmem:[%s583] sm:$0xf] %v588
      %590 = vst.msk [vmem:[%s583 + $0x4] sm:$0xf] %vm172, %v278
      %vm591 = vcmask 24576
      %vm592 = vmand %vm591, %vm260
      %v593 = vld [vmem:[%s583 + $0x8] sm:$0x1]
      %v594 = vsel %vm592, %v279, %v593
      %595 = vst [vmem:[%s583 + $0x8] sm:$0x1] %v594
      %v596 = vld [vmem:[%s583 + $0xc] sm:$0xf]
      %v597 = vsel %vm586, %v286, %v596
      %598 = vst [vmem:[%s583 + $0xc] sm:$0xf] %v597
      %599 = vst.msk [vmem:[%s583 + $0x10] sm:$0xf] %vm172, %v295
      %v600 = vld [vmem:[%s583 + $0x14] sm:$0x1]
      %v601 = vsel %vm592, %v296, %v600
      %602 = vst [vmem:[%s583 + $0x14] sm:$0x1] %v601
      %v603 = vld [vmem:[%s583 + $0x18] sm:$0xf]
      %v604 = vsel %vm586, %v303, %v603
      %605 = vst [vmem:[%s583 + $0x18] sm:$0xf] %v604
      %606 = vst.msk [vmem:[%s583 + $0x1c] sm:$0xf] %vm172, %v312
      %v607 = vld [vmem:[%s583 + $0x20] sm:$0x1]
      %v608 = vsel %vm592, %v313, %v607
      %609 = vst [vmem:[%s583 + $0x20] sm:$0x1] %v608
      %v610 = vld [vmem:[%s583 + $0x24] sm:$0xf]
      %v611 = vsel %vm586, %v320, %v610
      %612 = vst [vmem:[%s583 + $0x24] sm:$0xf] %v611
      %613 = vst.msk [vmem:[%s583 + $0x28] sm:$0xf] %vm172, %v329
      %v614 = vld [vmem:[%s583 + $0x2c] sm:$0x1]
      %v615 = vsel %vm592, %v330, %v614
      %616 = vst [vmem:[%s583 + $0x2c] sm:$0x1] %v615
      %v617 = vld [vmem:[%s583 + $0x30] sm:$0xf]
      %v618 = vsel %vm586, %v337, %v617
      %619 = vst [vmem:[%s583 + $0x30] sm:$0xf] %v618
      %620 = vst.msk [vmem:[%s583 + $0x34] sm:$0xf] %vm172, %v346
      %v621 = vld [vmem:[%s583 + $0x38] sm:$0x1]
      %v622 = vsel %vm592, %v347, %v621
      %623 = vst [vmem:[%s583 + $0x38] sm:$0x1] %v622
      %v624 = vld [vmem:[%s583 + $0x3c] sm:$0xf]
      %v625 = vsel %vm586, %v354, %v624
      %626 = vst [vmem:[%s583 + $0x3c] sm:$0xf] %v625
      %627 = vst.msk [vmem:[%s583 + $0x40] sm:$0xf] %vm172, %v363
      %v628 = vld [vmem:[%s583 + $0x44] sm:$0x1]
      %v629 = vsel %vm592, %v364, %v628
      %630 = vst [vmem:[%s583 + $0x44] sm:$0x1] %v629
      %v631 = vld [vmem:[%s583 + $0x48] sm:$0xf]
      %v632 = vsel %vm586, %v371, %v631
      %633 = vst [vmem:[%s583 + $0x48] sm:$0xf] %v632
      %634 = vst.msk [vmem:[%s583 + $0x4c] sm:$0xf] %vm172, %v380
      %v635 = vld [vmem:[%s583 + $0x50] sm:$0x1]
      %v636 = vsel %vm592, %v381, %v635
      %637 = vst [vmem:[%s583 + $0x50] sm:$0x1] %v636
      %v638 = vld [vmem:[%s583 + $0x54] sm:$0xf]
      %v639 = vsel %vm586, %v388, %v638
      %640 = vst [vmem:[%s583 + $0x54] sm:$0xf] %v639
      %641 = vst.msk [vmem:[%s583 + $0x58] sm:$0xf] %vm172, %v397
      %v642 = vld [vmem:[%s583 + $0x5c] sm:$0x1]
      %v643 = vsel %vm592, %v398, %v642
      %644 = vst [vmem:[%s583 + $0x5c] sm:$0x1] %v643
      %v645 = vld [vmem:[%s583 + $0x60] sm:$0xf]
      %v646 = vsel %vm586, %v405, %v645
      %647 = vst [vmem:[%s583 + $0x60] sm:$0xf] %v646
      %648 = vst.msk [vmem:[%s583 + $0x64] sm:$0xf] %vm172, %v414
      %v649 = vld [vmem:[%s583 + $0x68] sm:$0x1]
      %v650 = vsel %vm592, %v415, %v649
      %651 = vst [vmem:[%s583 + $0x68] sm:$0x1] %v650
      %v652 = vld [vmem:[%s583 + $0x6c] sm:$0xf]
      %v653 = vsel %vm586, %v422, %v652
      %654 = vst [vmem:[%s583 + $0x6c] sm:$0xf] %v653
      %655 = vst.msk [vmem:[%s583 + $0x70] sm:$0xf] %vm172, %v431
      %v656 = vld [vmem:[%s583 + $0x74] sm:$0x1]
      %v657 = vsel %vm592, %v432, %v656
      %658 = vst [vmem:[%s583 + $0x74] sm:$0x1] %v657
      %v659 = vld [vmem:[%s583 + $0x78] sm:$0xf]
      %v660 = vsel %vm586, %v439, %v659
      %661 = vst [vmem:[%s583 + $0x78] sm:$0xf] %v660
      %662 = vst.msk [vmem:[%s583 + $0x7c] sm:$0xf] %vm172, %v448
      %v663 = vld [vmem:[%s583 + $0x80] sm:$0x1]
      %v664 = vsel %vm592, %v449, %v663
      %665 = vst [vmem:[%s583 + $0x80] sm:$0x1] %v664
      %v666 = vld [vmem:[%s583 + $0x84] sm:$0xf]
      %v667 = vsel %vm586, %v456, %v666
      %668 = vst [vmem:[%s583 + $0x84] sm:$0xf] %v667
      %669 = vst.msk [vmem:[%s583 + $0x88] sm:$0xf] %vm172, %v465
      %v670 = vld [vmem:[%s583 + $0x8c] sm:$0x1]
      %v671 = vsel %vm592, %v466, %v670
      %672 = vst [vmem:[%s583 + $0x8c] sm:$0x1] %v671
      %v673 = vld [vmem:[%s583 + $0x90] sm:$0xf]
      %v674 = vsel %vm586, %v473, %v673
      %675 = vst [vmem:[%s583 + $0x90] sm:$0xf] %v674
      %676 = vst.msk [vmem:[%s583 + $0x94] sm:$0xf] %vm172, %v482
      %v677 = vld [vmem:[%s583 + $0x98] sm:$0x1]
      %v678 = vsel %vm592, %v483, %v677
      %679 = vst [vmem:[%s583 + $0x98] sm:$0x1] %v678
      %v680 = vld [vmem:[%s583 + $0x9c] sm:$0xf]
      %v681 = vsel %vm586, %v490, %v680
      %682 = vst [vmem:[%s583 + $0x9c] sm:$0xf] %v681
      %683 = vst.msk [vmem:[%s583 + $0xa0] sm:$0xf] %vm172, %v499
      %v684 = vld [vmem:[%s583 + $0xa4] sm:$0x1]
      %v685 = vsel %vm592, %v500, %v684
      %686 = vst [vmem:[%s583 + $0xa4] sm:$0x1] %v685
      %v687 = vld [vmem:[%s583 + $0xa8] sm:$0xf]
      %v688 = vsel %vm586, %v507, %v687
      %689 = vst [vmem:[%s583 + $0xa8] sm:$0xf] %v688
      %690 = vst.msk [vmem:[%s583 + $0xac] sm:$0xf] %vm172, %v516
      %v691 = vld [vmem:[%s583 + $0xb0] sm:$0x1]
      %v692 = vsel %vm592, %v517, %v691
      %693 = vst [vmem:[%s583 + $0xb0] sm:$0x1] %v692
      %v694 = vld [vmem:[%s583 + $0xb4] sm:$0xf]
      %v695 = vsel %vm586, %v524, %v694
      %696 = vst [vmem:[%s583 + $0xb4] sm:$0xf] %v695
      %697 = vst.msk [vmem:[%s583 + $0xb8] sm:$0xf] %vm172, %v533
      %v698 = vld [vmem:[%s583 + $0xbc] sm:$0x1]
      %v699 = vsel %vm592, %v534, %v698
      %700 = vst [vmem:[%s583 + $0xbc] sm:$0x1] %v699
      %v701 = vld [vmem:[#allocation2] sm:$0xf]
      %v702 = vld [vmem:[#allocation2 + $0x4] sm:$0xf]
      %v703 = vld [vmem:[#allocation2 + $0xc] sm:$0xf]
      %v704 = vld [vmem:[#allocation2 + $0x10] sm:$0xf]
      %v705 = vld [vmem:[#allocation2 + $0x18] sm:$0xf]
      %v706 = vld [vmem:[#allocation2 + $0x1c] sm:$0xf]
      %v707 = vld [vmem:[#allocation2 + $0x24] sm:$0xf]
      %v708 = vld [vmem:[#allocation2 + $0x28] sm:$0xf]
      %v709 = vld [vmem:[#allocation2 + $0x30] sm:$0xf]
      %v710 = vld [vmem:[#allocation2 + $0x34] sm:$0xf]
      %v711 = vld [vmem:[#allocation2 + $0x3c] sm:$0xf]
      %v712 = vld [vmem:[#allocation2 + $0x40] sm:$0xf]
      %v713 = vld [vmem:[#allocation2 + $0x48] sm:$0xf]
      %v714 = vld [vmem:[#allocation2 + $0x4c] sm:$0xf]
      %v715 = vld [vmem:[#allocation2 + $0x54] sm:$0xf]
      %v716 = vld [vmem:[#allocation2 + $0x58] sm:$0xf]
      %v717 = vld [vmem:[#allocation2 + $0x60] sm:$0xf]
      %v718 = vld [vmem:[#allocation2 + $0x64] sm:$0xf]
      %v719 = vld [vmem:[#allocation2 + $0x6c] sm:$0xf]
      %v720 = vld [vmem:[#allocation2 + $0x70] sm:$0xf]
      %v721 = vld [vmem:[#allocation2 + $0x78] sm:$0xf]
      %v722 = vld [vmem:[#allocation2 + $0x7c] sm:$0xf]
      %v723 = vld [vmem:[#allocation2 + $0x84] sm:$0xf]
      %v724 = vld [vmem:[#allocation2 + $0x88] sm:$0xf]
      %v725 = vld [vmem:[#allocation2 + $0x90] sm:$0xf]
      %v726 = vld [vmem:[#allocation2 + $0x94] sm:$0xf]
      %v727 = vld [vmem:[#allocation2 + $0x9c] sm:$0xf]
      %v728 = vld [vmem:[#allocation2 + $0xa0] sm:$0xf]
      %v729 = vld [vmem:[#allocation2 + $0xa8] sm:$0xf]
      %v730 = vld [vmem:[#allocation2 + $0xac] sm:$0xf]
      %v731 = vld [vmem:[#allocation2 + $0xb4] sm:$0xf]
      %v732 = vld [vmem:[#allocation2 + $0xb8] sm:$0xf]
      %v733 = vld [vmem:[#allocation2 + $0x8] sm:$0x1]
      %v734 = vld [vmem:[#allocation2 + $0x14] sm:$0x1]
      %v735 = vld [vmem:[#allocation2 + $0x20] sm:$0x1]
      %v736 = vld [vmem:[#allocation2 + $0x2c] sm:$0x1]
      %v737 = vld [vmem:[#allocation2 + $0x38] sm:$0x1]
      %v738 = vld [vmem:[#allocation2 + $0x44] sm:$0x1]
      %v739 = vld [vmem:[#allocation2 + $0x50] sm:$0x1]
      %v740 = vld [vmem:[#allocation2 + $0x5c] sm:$0x1]
      %v741 = vld [vmem:[#allocation2 + $0x68] sm:$0x1]
      %v742 = vld [vmem:[#allocation2 + $0x74] sm:$0x1]
      %v743 = vld [vmem:[#allocation2 + $0x80] sm:$0x1]
      %v744 = vld [vmem:[#allocation2 + $0x8c] sm:$0x1]
      %v745 = vld [vmem:[#allocation2 + $0x98] sm:$0x1]
      %v746 = vld [vmem:[#allocation2 + $0xa4] sm:$0x1]
      %v747 = vld [vmem:[#allocation2 + $0xb0] sm:$0x1]
      %v748 = vld [vmem:[#allocation2 + $0xbc] sm:$0x1]
      %v749 = vld [vmem:[#allocation2] sm:$0xe]
      %v750 = vld [vmem:[#allocation2 + $0xc] sm:$0xe]
      %v751 = vld [vmem:[#allocation2 + $0x18] sm:$0xe]
      %v752 = vld [vmem:[#allocation2 + $0x24] sm:$0xe]
      %v753 = vld [vmem:[#allocation2 + $0x30] sm:$0xe]
      %v754 = vld [vmem:[#allocation2 + $0x3c] sm:$0xe]
      %v755 = vld [vmem:[#allocation2 + $0x48] sm:$0xe]
      %v756 = vld [vmem:[#allocation2 + $0x54] sm:$0xe]
      %v757 = vld [vmem:[#allocation2 + $0x60] sm:$0xe]
      %v758 = vld [vmem:[#allocation2 + $0x6c] sm:$0xe]
      %v759 = vld [vmem:[#allocation2 + $0x78] sm:$0xe]
      %v760 = vld [vmem:[#allocation2 + $0x84] sm:$0xe]
      %v761 = vld [vmem:[#allocation2 + $0x90] sm:$0xe]
      %v762 = vld [vmem:[#allocation2 + $0x9c] sm:$0xe]
      %v763 = vld [vmem:[#allocation2 + $0xa8] sm:$0xe]
      %v764 = vld [vmem:[#allocation2 + $0xb4] sm:$0xe]
      %v765 = vld [vmem:[%s583] sm:$0xf]
      %v766 = vld [vmem:[%s583 + $0x4] sm:$0xf]
      %v767 = vld [vmem:[%s583 + $0xc] sm:$0xf]
      %v768 = vld [vmem:[%s583 + $0x10] sm:$0xf]
      %v769 = vld [vmem:[%s583 + $0x18] sm:$0xf]
      %v770 = vld [vmem:[%s583 + $0x1c] sm:$0xf]
      %v771 = vld [vmem:[%s583 + $0x24] sm:$0xf]
      %v772 = vld [vmem:[%s583 + $0x28] sm:$0xf]
      %v773 = vld [vmem:[%s583 + $0x30] sm:$0xf]
      %v774 = vld [vmem:[%s583 + $0x34] sm:$0xf]
      %v775 = vld [vmem:[%s583 + $0x3c] sm:$0xf]
      %v776 = vld [vmem:[%s583 + $0x40] sm:$0xf]
      %v777 = vld [vmem:[%s583 + $0x48] sm:$0xf]
      %v778 = vld [vmem:[%s583 + $0x4c] sm:$0xf]
      %v779 = vld [vmem:[%s583 + $0x54] sm:$0xf]
      %v780 = vld [vmem:[%s583 + $0x58] sm:$0xf]
      %v781 = vld [vmem:[%s583 + $0x60] sm:$0xf]
      %v782 = vld [vmem:[%s583 + $0x64] sm:$0xf]
      %v783 = vld [vmem:[%s583 + $0x6c] sm:$0xf]
      %v784 = vld [vmem:[%s583 + $0x70] sm:$0xf]
      %v785 = vld [vmem:[%s583 + $0x78] sm:$0xf]
      %v786 = vld [vmem:[%s583 + $0x7c] sm:$0xf]
      %v787 = vld [vmem:[%s583 + $0x84] sm:$0xf]
      %v788 = vld [vmem:[%s583 + $0x88] sm:$0xf]
      %v789 = vld [vmem:[%s583 + $0x90] sm:$0xf]
      %v790 = vld [vmem:[%s583 + $0x94] sm:$0xf]
      %v791 = vld [vmem:[%s583 + $0x9c] sm:$0xf]
      %v792 = vld [vmem:[%s583 + $0xa0] sm:$0xf]
      %v793 = vld [vmem:[%s583 + $0xa8] sm:$0xf]
      %v794 = vld [vmem:[%s583 + $0xac] sm:$0xf]
      %v795 = vld [vmem:[%s583 + $0xb4] sm:$0xf]
      %v796 = vld [vmem:[%s583 + $0xb8] sm:$0xf]
      %v797 = vld [vmem:[%s583 + $0x8] sm:$0x1]
      %v798 = vld [vmem:[%s583 + $0x14] sm:$0x1]
      %v799 = vld [vmem:[%s583 + $0x20] sm:$0x1]
      %v800 = vld [vmem:[%s583 + $0x2c] sm:$0x1]
      %v801 = vld [vmem:[%s583 + $0x38] sm:$0x1]
      %v802 = vld [vmem:[%s583 + $0x44] sm:$0x1]
      %v803 = vld [vmem:[%s583 + $0x50] sm:$0x1]
      %v804 = vld [vmem:[%s583 + $0x5c] sm:$0x1]
      %v805 = vld [vmem:[%s583 + $0x68] sm:$0x1]
      %v806 = vld [vmem:[%s583 + $0x74] sm:$0x1]
      %v807 = vld [vmem:[%s583 + $0x80] sm:$0x1]
      %v808 = vld [vmem:[%s583 + $0x8c] sm:$0x1]
      %v809 = vld [vmem:[%s583 + $0x98] sm:$0x1]
      %v810 = vld [vmem:[%s583 + $0xa4] sm:$0x1]
      %v811 = vld [vmem:[%s583 + $0xb0] sm:$0x1]
      %v812 = vld [vmem:[%s583 + $0xbc] sm:$0x1]
      %v813 = vld [vmem:[%s583] sm:$0xe]
      %v814 = vld [vmem:[%s583 + $0xc] sm:$0xe]
      %v815 = vld [vmem:[%s583 + $0x18] sm:$0xe]
      %v816 = vld [vmem:[%s583 + $0x24] sm:$0xe]
      %v817 = vld [vmem:[%s583 + $0x30] sm:$0xe]
      %v818 = vld [vmem:[%s583 + $0x3c] sm:$0xe]
      %v819 = vld [vmem:[%s583 + $0x48] sm:$0xe]
      %v820 = vld [vmem:[%s583 + $0x54] sm:$0xe]
      %v821 = vld [vmem:[%s583 + $0x60] sm:$0xe]
      %v822 = vld [vmem:[%s583 + $0x6c] sm:$0xe]
      %v823 = vld [vmem:[%s583 + $0x78] sm:$0xe]
      %v824 = vld [vmem:[%s583 + $0x84] sm:$0xe]
      %v825 = vld [vmem:[%s583 + $0x90] sm:$0xe]
      %v826 = vld [vmem:[%s583 + $0x9c] sm:$0xe]
      %v827 = vld [vmem:[%s583 + $0xa8] sm:$0xe]
      %v828 = vld [vmem:[%s583 + $0xb4] sm:$0xe]
      %s829 = scalar_lea.vmem [#allocation2], 24
      %v830 = vld [vmem:[%s829] sm:$0xf]
      %v831 = vld [vmem:[%s829 + $0x4] sm:$0xf]
      %v832 = vld [vmem:[%s829 + $0xc] sm:$0xf]
      %v833 = vld [vmem:[%s829 + $0x10] sm:$0xf]
      %v834 = vld [vmem:[%s829 + $0x18] sm:$0xf]
      %v835 = vld [vmem:[%s829 + $0x1c] sm:$0xf]
      %v836 = vld [vmem:[%s829 + $0x24] sm:$0xf]
      %v837 = vld [vmem:[%s829 + $0x28] sm:$0xf]
      %v838 = vld [vmem:[%s829 + $0x30] sm:$0xf]
      %v839 = vld [vmem:[%s829 + $0x34] sm:$0xf]
      %v840 = vld [vmem:[%s829 + $0x3c] sm:$0xf]
      %v841 = vld [vmem:[%s829 + $0x40] sm:$0xf]
      %v842 = vld [vmem:[%s829 + $0x48] sm:$0xf]
      %v843 = vld [vmem:[%s829 + $0x4c] sm:$0xf]
      %v844 = vld [vmem:[%s829 + $0x54] sm:$0xf]
      %v845 = vld [vmem:[%s829 + $0x58] sm:$0xf]
      %v846 = vld [vmem:[%s829 + $0x60] sm:$0xf]
      %v847 = vld [vmem:[%s829 + $0x64] sm:$0xf]
      %v848 = vld [vmem:[%s829 + $0x6c] sm:$0xf]
      %v849 = vld [vmem:[%s829 + $0x70] sm:$0xf]
      %v850 = vld [vmem:[%s829 + $0x78] sm:$0xf]
      %v851 = vld [vmem:[%s829 + $0x7c] sm:$0xf]
      %v852 = vld [vmem:[%s829 + $0x84] sm:$0xf]
      %v853 = vld [vmem:[%s829 + $0x88] sm:$0xf]
      %v854 = vld [vmem:[%s829 + $0x90] sm:$0xf]
      %v855 = vld [vmem:[%s829 + $0x94] sm:$0xf]
      %v856 = vld [vmem:[%s829 + $0x9c] sm:$0xf]
      %v857 = vld [vmem:[%s829 + $0xa0] sm:$0xf]
      %v858 = vld [vmem:[%s829 + $0xa8] sm:$0xf]
      %v859 = vld [vmem:[%s829 + $0xac] sm:$0xf]
      %v860 = vld [vmem:[%s829 + $0xb4] sm:$0xf]
      %v861 = vld [vmem:[%s829 + $0xb8] sm:$0xf]
      %v862 = vld [vmem:[%s829 + $0x8] sm:$0x1]
      %v863 = vld [vmem:[%s829 + $0x14] sm:$0x1]
      %v864 = vld [vmem:[%s829 + $0x20] sm:$0x1]
      %v865 = vld [vmem:[%s829 + $0x2c] sm:$0x1]
      %v866 = vld [vmem:[%s829 + $0x38] sm:$0x1]
      %v867 = vld [vmem:[%s829 + $0x44] sm:$0x1]
      %v868 = vld [vmem:[%s829 + $0x50] sm:$0x1]
      %v869 = vld [vmem:[%s829 + $0x5c] sm:$0x1]
      %v870 = vld [vmem:[%s829 + $0x68] sm:$0x1]
      %v871 = vld [vmem:[%s829 + $0x74] sm:$0x1]
      %v872 = vld [vmem:[%s829 + $0x80] sm:$0x1]
      %v873 = vld [vmem:[%s829 + $0x8c] sm:$0x1]
      %v874 = vld [vmem:[%s829 + $0x98] sm:$0x1]
      %v875 = vld [vmem:[%s829 + $0xa4] sm:$0x1]
      %v876 = vld [vmem:[%s829 + $0xb0] sm:$0x1]
      %v877 = vld [vmem:[%s829 + $0xbc] sm:$0x1]
      %v878 = vld [vmem:[%s829] sm:$0xe]
      %v879 = vld [vmem:[%s829 + $0xc] sm:$0xe]
      %v880 = vld [vmem:[%s829 + $0x18] sm:$0xe]
      %v881 = vld [vmem:[%s829 + $0x24] sm:$0xe]
      %v882 = vld [vmem:[%s829 + $0x30] sm:$0xe]
      %v883 = vld [vmem:[%s829 + $0x3c] sm:$0xe]
      %v884 = vld [vmem:[%s829 + $0x48] sm:$0xe]
      %v885 = vld [vmem:[%s829 + $0x54] sm:$0xe]
      %v886 = vld [vmem:[%s829 + $0x60] sm:$0xe]
      %v887 = vld [vmem:[%s829 + $0x6c] sm:$0xe]
      %v888 = vld [vmem:[%s829 + $0x78] sm:$0xe]
      %v889 = vld [vmem:[%s829 + $0x84] sm:$0xe]
      %v890 = vld [vmem:[%s829 + $0x90] sm:$0xe]
      %v891 = vld [vmem:[%s829 + $0x9c] sm:$0xe]
      %v892 = vld [vmem:[%s829 + $0xa8] sm:$0xe]
      %v893 = vld [vmem:[%s829 + $0xb4] sm:$0xe]
      %v926 = vunpack.c.l.b16 %v701
      %v927 = vunpack.c.l.b16 %v702
      %v928 = vunpack.c.l.b16 %v703
      %v929 = vunpack.c.l.b16 %v704
      %v930 = vunpack.c.l.b16 %v705
      %v931 = vunpack.c.l.b16 %v706
      %v932 = vunpack.c.l.b16 %v707
      %v933 = vunpack.c.l.b16 %v708
      %v934 = vunpack.c.l.b16 %v709
      %v935 = vunpack.c.l.b16 %v710
      %v936 = vunpack.c.l.b16 %v711
      %v937 = vunpack.c.l.b16 %v712
      %v938 = vunpack.c.l.b16 %v713
      %v939 = vunpack.c.l.b16 %v714
      %v940 = vunpack.c.l.b16 %v715
      %v941 = vunpack.c.l.b16 %v716
      %v942 = vunpack.c.l.b16 %v717
      %v943 = vunpack.c.l.b16 %v718
      %v944 = vunpack.c.l.b16 %v719
      %v945 = vunpack.c.l.b16 %v720
      %v946 = vunpack.c.l.b16 %v721
      %v947 = vunpack.c.l.b16 %v722
      %v948 = vunpack.c.l.b16 %v723
      %v949 = vunpack.c.l.b16 %v724
      %v950 = vunpack.c.l.b16 %v725
      %v951 = vunpack.c.l.b16 %v726
      %v952 = vunpack.c.l.b16 %v727
      %v953 = vunpack.c.l.b16 %v728
      %v954 = vunpack.c.l.b16 %v729
      %v955 = vunpack.c.l.b16 %v730
      %v956 = vunpack.c.l.b16 %v731
      %v957 = vunpack.c.l.b16 %v732
      %v958 = vpack.c.b16 %v927, %v926
      %v959 = vpack.c.b16 %v929, %v928
      %v960 = vpack.c.b16 %v931, %v930
      %v961 = vpack.c.b16 %v933, %v932
      %v962 = vpack.c.b16 %v935, %v934
      %v963 = vpack.c.b16 %v937, %v936
      %v964 = vpack.c.b16 %v939, %v938
      %v965 = vpack.c.b16 %v941, %v940
      %v966 = vpack.c.b16 %v943, %v942
      %v967 = vpack.c.b16 %v945, %v944
      %v968 = vpack.c.b16 %v947, %v946
      %v969 = vpack.c.b16 %v949, %v948
      %v970 = vpack.c.b16 %v951, %v950
      %v971 = vpack.c.b16 %v953, %v952
      %v972 = vpack.c.b16 %v955, %v954
      %v973 = vpack.c.b16 %v957, %v956
      %v990 = vunpack.c.l.b16 %v733
      %v991 = vunpack.c.l.b16 %v734
      %v992 = vunpack.c.l.b16 %v735
      %v993 = vunpack.c.l.b16 %v736
      %v994 = vunpack.c.l.b16 %v737
      %v995 = vunpack.c.l.b16 %v738
      %v996 = vunpack.c.l.b16 %v739
      %v997 = vunpack.c.l.b16 %v740
      %v998 = vunpack.c.l.b16 %v741
      %v999 = vunpack.c.l.b16 %v742
      %v1000 = vunpack.c.l.b16 %v743
      %v1001 = vunpack.c.l.b16 %v744
      %v1002 = vunpack.c.l.b16 %v745
      %v1003 = vunpack.c.l.b16 %v746
      %v1004 = vunpack.c.l.b16 %v747
      %v1005 = vunpack.c.l.b16 %v748
      %v1006 = vpack.c.b16 %v990, %v990
      %v1007 = vpack.c.b16 %v991, %v991
      %v1008 = vpack.c.b16 %v992, %v992
      %v1009 = vpack.c.b16 %v993, %v993
      %v1010 = vpack.c.b16 %v994, %v994
      %v1011 = vpack.c.b16 %v995, %v995
      %v1012 = vpack.c.b16 %v996, %v996
      %v1013 = vpack.c.b16 %v997, %v997
      %v1014 = vpack.c.b16 %v998, %v998
      %v1015 = vpack.c.b16 %v999, %v999
      %v1016 = vpack.c.b16 %v1000, %v1000
      %v1017 = vpack.c.b16 %v1001, %v1001
      %v1018 = vpack.c.b16 %v1002, %v1002
      %v1019 = vpack.c.b16 %v1003, %v1003
      %v1020 = vpack.c.b16 %v1004, %v1004
      %v1021 = vpack.c.b16 %v1005, %v1005
      %vm1022 = vsmask.f32 7424
      %v1024 = vshrl.u32 %v958, 16
      %v1026 = vshll.u32 %v958, 16
      %v1028 = vrot.slane %v1026, 1
      %v1029 = vor.u32 %v1024, %v1028
      %v1031 = vshll.u32 %v1006, 16
      %v1033 = vrot.slane %v1031, 1
      %v1034 = vsel %vm1022, %v1029, %v1033
      %v1036 = vshrl.u32 %v959, 16
      %v1038 = vshll.u32 %v959, 16
      %v1040 = vrot.slane %v1038, 1
      %v1041 = vor.u32 %v1036, %v1040
      %v1043 = vshll.u32 %v1007, 16
      %v1045 = vrot.slane %v1043, 1
      %v1046 = vsel %vm1022, %v1041, %v1045
      %v1048 = vshrl.u32 %v960, 16
      %v1050 = vshll.u32 %v960, 16
      %v1052 = vrot.slane %v1050, 1
      %v1053 = vor.u32 %v1048, %v1052
      %v1055 = vshll.u32 %v1008, 16
      %v1057 = vrot.slane %v1055, 1
      %v1058 = vsel %vm1022, %v1053, %v1057
      %v1060 = vshrl.u32 %v961, 16
      %v1062 = vshll.u32 %v961, 16
      %v1064 = vrot.slane %v1062, 1
      %v1065 = vor.u32 %v1060, %v1064
      %v1067 = vshll.u32 %v1009, 16
      %v1069 = vrot.slane %v1067, 1
      %v1070 = vsel %vm1022, %v1065, %v1069
      %v1072 = vshrl.u32 %v962, 16
      %v1074 = vshll.u32 %v962, 16
      %v1076 = vrot.slane %v1074, 1
      %v1077 = vor.u32 %v1072, %v1076
      %v1079 = vshll.u32 %v1010, 16
      %v1081 = vrot.slane %v1079, 1
      %v1082 = vsel %vm1022, %v1077, %v1081
      %v1084 = vshrl.u32 %v963, 16
      %v1086 = vshll.u32 %v963, 16
      %v1088 = vrot.slane %v1086, 1
      %v1089 = vor.u32 %v1084, %v1088
      %v1091 = vshll.u32 %v1011, 16
      %v1093 = vrot.slane %v1091, 1
      %v1094 = vsel %vm1022, %v1089, %v1093
      %v1096 = vshrl.u32 %v964, 16
      %v1098 = vshll.u32 %v964, 16
      %v1100 = vrot.slane %v1098, 1
      %v1101 = vor.u32 %v1096, %v1100
      %v1103 = vshll.u32 %v1012, 16
      %v1105 = vrot.slane %v1103, 1
      %v1106 = vsel %vm1022, %v1101, %v1105
      %v1108 = vshrl.u32 %v965, 16
      %v1110 = vshll.u32 %v965, 16
      %v1112 = vrot.slane %v1110, 1
      %v1113 = vor.u32 %v1108, %v1112
      %v1115 = vshll.u32 %v1013, 16
      %v1117 = vrot.slane %v1115, 1
      %v1118 = vsel %vm1022, %v1113, %v1117
      %v1120 = vshrl.u32 %v966, 16
      %v1122 = vshll.u32 %v966, 16
      %v1124 = vrot.slane %v1122, 1
      %v1125 = vor.u32 %v1120, %v1124
      %v1127 = vshll.u32 %v1014, 16
      %v1129 = vrot.slane %v1127, 1
      %v1130 = vsel %vm1022, %v1125, %v1129
      %v1132 = vshrl.u32 %v967, 16
      %v1134 = vshll.u32 %v967, 16
      %v1136 = vrot.slane %v1134, 1
      %v1137 = vor.u32 %v1132, %v1136
      %v1139 = vshll.u32 %v1015, 16
      %v1141 = vrot.slane %v1139, 1
      %v1142 = vsel %vm1022, %v1137, %v1141
      %v1144 = vshrl.u32 %v968, 16
      %v1146 = vshll.u32 %v968, 16
      %v1148 = vrot.slane %v1146, 1
      %v1149 = vor.u32 %v1144, %v1148
      %v1151 = vshll.u32 %v1016, 16
      %v1153 = vrot.slane %v1151, 1
      %v1154 = vsel %vm1022, %v1149, %v1153
      %v1156 = vshrl.u32 %v969, 16
      %v1158 = vshll.u32 %v969, 16
      %v1160 = vrot.slane %v1158, 1
      %v1161 = vor.u32 %v1156, %v1160
      %v1163 = vshll.u32 %v1017, 16
      %v1165 = vrot.slane %v1163, 1
      %v1166 = vsel %vm1022, %v1161, %v1165
      %v1168 = vshrl.u32 %v970, 16
      %v1170 = vshll.u32 %v970, 16
      %v1172 = vrot.slane %v1170, 1
      %v1173 = vor.u32 %v1168, %v1172
      %v1175 = vshll.u32 %v1018, 16
      %v1177 = vrot.slane %v1175, 1
      %v1178 = vsel %vm1022, %v1173, %v1177
      %v1180 = vshrl.u32 %v971, 16
      %v1182 = vshll.u32 %v971, 16
      %v1184 = vrot.slane %v1182, 1
      %v1185 = vor.u32 %v1180, %v1184
      %v1187 = vshll.u32 %v1019, 16
      %v1189 = vrot.slane %v1187, 1
      %v1190 = vsel %vm1022, %v1185, %v1189
      %v1192 = vshrl.u32 %v972, 16
      %v1194 = vshll.u32 %v972, 16
      %v1196 = vrot.slane %v1194, 1
      %v1197 = vor.u32 %v1192, %v1196
      %v1199 = vshll.u32 %v1020, 16
      %v1201 = vrot.slane %v1199, 1
      %v1202 = vsel %vm1022, %v1197, %v1201
      %v1204 = vshrl.u32 %v973, 16
      %v1206 = vshll.u32 %v973, 16
      %v1208 = vrot.slane %v1206, 1
      %v1209 = vor.u32 %v1204, %v1208
      %v1211 = vshll.u32 %v1021, 16
      %v1213 = vrot.slane %v1211, 1
      %v1214 = vsel %vm1022, %v1209, %v1213
      %1215 = vrot.lane.b32.xlu0 %v1034, 4
      %v1216 = vpop.permute.xlu0 %1215
      %1217 = vrot.lane.b32.xlu0 %v1046, 4
      %v1218 = vpop.permute.xlu0 %1217
      %1219 = vrot.lane.b32.xlu0 %v1058, 4
      %v1220 = vpop.permute.xlu0 %1219
      %1221 = vrot.lane.b32.xlu0 %v1070, 4
      %v1222 = vpop.permute.xlu0 %1221
      %1223 = vrot.lane.b32.xlu0 %v1082, 4
      %v1224 = vpop.permute.xlu0 %1223
      %1225 = vrot.lane.b32.xlu0 %v1094, 4
      %v1226 = vpop.permute.xlu0 %1225
      %1227 = vrot.lane.b32.xlu0 %v1106, 4
      %v1228 = vpop.permute.xlu0 %1227
      %1229 = vrot.lane.b32.xlu0 %v1118, 4
      %v1230 = vpop.permute.xlu0 %1229
      %1231 = vrot.lane.b32.xlu0 %v1130, 4
      %v1232 = vpop.permute.xlu0 %1231
      %1233 = vrot.lane.b32.xlu0 %v1142, 4
      %v1234 = vpop.permute.xlu0 %1233
      %1235 = vrot.lane.b32.xlu0 %v1154, 4
      %v1236 = vpop.permute.xlu0 %1235
      %1237 = vrot.lane.b32.xlu0 %v1166, 4
      %v1238 = vpop.permute.xlu0 %1237
      %1239 = vrot.lane.b32.xlu0 %v1178, 4
      %v1240 = vpop.permute.xlu0 %1239
      %1241 = vrot.lane.b32.xlu0 %v1190, 4
      %v1242 = vpop.permute.xlu0 %1241
      %1243 = vrot.lane.b32.xlu0 %v1202, 4
      %v1244 = vpop.permute.xlu0 %1243
      %1245 = vrot.lane.b32.xlu0 %v1214, 4
      %v1246 = vpop.permute.xlu0 %1245
      %v1263 = vunpack.c.l.b16 %v749
      %v1264 = vunpack.c.l.b16 %v750
      %v1265 = vunpack.c.l.b16 %v751
      %v1266 = vunpack.c.l.b16 %v752
      %v1267 = vunpack.c.l.b16 %v753
      %v1268 = vunpack.c.l.b16 %v754
      %v1269 = vunpack.c.l.b16 %v755
      %v1270 = vunpack.c.l.b16 %v756
      %v1271 = vunpack.c.l.b16 %v757
      %v1272 = vunpack.c.l.b16 %v758
      %v1273 = vunpack.c.l.b16 %v759
      %v1274 = vunpack.c.l.b16 %v760
      %v1275 = vunpack.c.l.b16 %v761
      %v1276 = vunpack.c.l.b16 %v762
      %v1277 = vunpack.c.l.b16 %v763
      %v1278 = vunpack.c.l.b16 %v764
      %v1279 = vpack.c.b16 %v927, %v1263
      %v1280 = vpack.c.b16 %v929, %v1264
      %v1281 = vpack.c.b16 %v931, %v1265
      %v1282 = vpack.c.b16 %v933, %v1266
      %v1283 = vpack.c.b16 %v935, %v1267
      %v1284 = vpack.c.b16 %v937, %v1268
      %v1285 = vpack.c.b16 %v939, %v1269
      %v1286 = vpack.c.b16 %v941, %v1270
      %v1287 = vpack.c.b16 %v943, %v1271
      %v1288 = vpack.c.b16 %v945, %v1272
      %v1289 = vpack.c.b16 %v947, %v1273
      %v1290 = vpack.c.b16 %v949, %v1274
      %v1291 = vpack.c.b16 %v951, %v1275
      %v1292 = vpack.c.b16 %v953, %v1276
      %v1293 = vpack.c.b16 %v955, %v1277
      %v1294 = vpack.c.b16 %v957, %v1278
      %vm1295 = vcmask 1046528
      %v1296 = vrot.slane %v1279, 1
      %v1297 = vrot.slane %v1006, 1
      %v1298 = vsel %vm1295, %v1296, %v1297
      %v1299 = vrot.slane %v1280, 1
      %v1300 = vrot.slane %v1007, 1
      %v1301 = vsel %vm1295, %v1299, %v1300
      %v1302 = vrot.slane %v1281, 1
      %v1303 = vrot.slane %v1008, 1
      %v1304 = vsel %vm1295, %v1302, %v1303
      %v1305 = vrot.slane %v1282, 1
      %v1306 = vrot.slane %v1009, 1
      %v1307 = vsel %vm1295, %v1305, %v1306
      %v1308 = vrot.slane %v1283, 1
      %v1309 = vrot.slane %v1010, 1
      %v1310 = vsel %vm1295, %v1308, %v1309
      %v1311 = vrot.slane %v1284, 1
      %v1312 = vrot.slane %v1011, 1
      %v1313 = vsel %vm1295, %v1311, %v1312
      %v1314 = vrot.slane %v1285, 1
      %v1315 = vrot.slane %v1012, 1
      %v1316 = vsel %vm1295, %v1314, %v1315
      %v1317 = vrot.slane %v1286, 1
      %v1318 = vrot.slane %v1013, 1
      %v1319 = vsel %vm1295, %v1317, %v1318
      %v1320 = vrot.slane %v1287, 1
      %v1321 = vrot.slane %v1014, 1
      %v1322 = vsel %vm1295, %v1320, %v1321
      %v1323 = vrot.slane %v1288, 1
      %v1324 = vrot.slane %v1015, 1
      %v1325 = vsel %vm1295, %v1323, %v1324
      %v1326 = vrot.slane %v1289, 1
      %v1327 = vrot.slane %v1016, 1
      %v1328 = vsel %vm1295, %v1326, %v1327
      %v1329 = vrot.slane %v1290, 1
      %v1330 = vrot.slane %v1017, 1
      %v1331 = vsel %vm1295, %v1329, %v1330
      %v1332 = vrot.slane %v1291, 1
      %v1333 = vrot.slane %v1018, 1
      %v1334 = vsel %vm1295, %v1332, %v1333
      %v1335 = vrot.slane %v1292, 1
      %v1336 = vrot.slane %v1019, 1
      %v1337 = vsel %vm1295, %v1335, %v1336
      %v1338 = vrot.slane %v1293, 1
      %v1339 = vrot.slane %v1020, 1
      %v1340 = vsel %vm1295, %v1338, %v1339
      %v1341 = vrot.slane %v1294, 1
      %v1342 = vrot.slane %v1021, 1
      %v1343 = vsel %vm1295, %v1341, %v1342
      %1344 = vrot.lane.b32.xlu0 %v1298, 8
      %v1345 = vpop.permute.xlu0 %1344
      %1346 = vrot.lane.b32.xlu0 %v1301, 8
      %v1347 = vpop.permute.xlu0 %1346
      %1348 = vrot.lane.b32.xlu0 %v1304, 8
      %v1349 = vpop.permute.xlu0 %1348
      %1350 = vrot.lane.b32.xlu0 %v1307, 8
      %v1351 = vpop.permute.xlu0 %1350
      %1352 = vrot.lane.b32.xlu0 %v1310, 8
      %v1353 = vpop.permute.xlu0 %1352
      %1354 = vrot.lane.b32.xlu0 %v1313, 8
      %v1355 = vpop.permute.xlu0 %1354
      %1356 = vrot.lane.b32.xlu0 %v1316, 8
      %v1357 = vpop.permute.xlu0 %1356
      %1358 = vrot.lane.b32.xlu0 %v1319, 8
      %v1359 = vpop.permute.xlu0 %1358
      %1360 = vrot.lane.b32.xlu0 %v1322, 8
      %v1361 = vpop.permute.xlu0 %1360
      %1362 = vrot.lane.b32.xlu0 %v1325, 8
      %v1363 = vpop.permute.xlu0 %1362
      %1364 = vrot.lane.b32.xlu0 %v1328, 8
      %v1365 = vpop.permute.xlu0 %1364
      %1366 = vrot.lane.b32.xlu0 %v1331, 8
      %v1367 = vpop.permute.xlu0 %1366
      %1368 = vrot.lane.b32.xlu0 %v1334, 8
      %v1369 = vpop.permute.xlu0 %1368
      %1370 = vrot.lane.b32.xlu0 %v1337, 8
      %v1371 = vpop.permute.xlu0 %1370
      %1372 = vrot.lane.b32.xlu0 %v1340, 8
      %v1373 = vpop.permute.xlu0 %1372
      %1374 = vrot.lane.b32.xlu0 %v1343, 8
      %v1375 = vpop.permute.xlu0 %1374
      %v1408 = vunpack.c.l.b16 %v765
      %v1409 = vunpack.c.l.b16 %v766
      %v1410 = vunpack.c.l.b16 %v767
      %v1411 = vunpack.c.l.b16 %v768
      %v1412 = vunpack.c.l.b16 %v769
      %v1413 = vunpack.c.l.b16 %v770
      %v1414 = vunpack.c.l.b16 %v771
      %v1415 = vunpack.c.l.b16 %v772
      %v1416 = vunpack.c.l.b16 %v773
      %v1417 = vunpack.c.l.b16 %v774
      %v1418 = vunpack.c.l.b16 %v775
      %v1419 = vunpack.c.l.b16 %v776
      %v1420 = vunpack.c.l.b16 %v777
      %v1421 = vunpack.c.l.b16 %v778
      %v1422 = vunpack.c.l.b16 %v779
      %v1423 = vunpack.c.l.b16 %v780
      %v1424 = vunpack.c.l.b16 %v781
      %v1425 = vunpack.c.l.b16 %v782
      %v1426 = vunpack.c.l.b16 %v783
      %v1427 = vunpack.c.l.b16 %v784
      %v1428 = vunpack.c.l.b16 %v785
      %v1429 = vunpack.c.l.b16 %v786
      %v1430 = vunpack.c.l.b16 %v787
      %v1431 = vunpack.c.l.b16 %v788
      %v1432 = vunpack.c.l.b16 %v789
      %v1433 = vunpack.c.l.b16 %v790
      %v1434 = vunpack.c.l.b16 %v791
      %v1435 = vunpack.c.l.b16 %v792
      %v1436 = vunpack.c.l.b16 %v793
      %v1437 = vunpack.c.l.b16 %v794
      %v1438 = vunpack.c.l.b16 %v795
      %v1439 = vunpack.c.l.b16 %v796
      %v1440 = vpack.c.b16 %v1409, %v1408
      %v1441 = vpack.c.b16 %v1411, %v1410
      %v1442 = vpack.c.b16 %v1413, %v1412
      %v1443 = vpack.c.b16 %v1415, %v1414
      %v1444 = vpack.c.b16 %v1417, %v1416
      %v1445 = vpack.c.b16 %v1419, %v1418
      %v1446 = vpack.c.b16 %v1421, %v1420
      %v1447 = vpack.c.b16 %v1423, %v1422
      %v1448 = vpack.c.b16 %v1425, %v1424
      %v1449 = vpack.c.b16 %v1427, %v1426
      %v1450 = vpack.c.b16 %v1429, %v1428
      %v1451 = vpack.c.b16 %v1431, %v1430
      %v1452 = vpack.c.b16 %v1433, %v1432
      %v1453 = vpack.c.b16 %v1435, %v1434
      %v1454 = vpack.c.b16 %v1437, %v1436
      %v1455 = vpack.c.b16 %v1439, %v1438
      %1456 = vrot.lane.b32.xlu0 %v1440, 12
      %v1457 = vpop.permute.xlu0 %1456
      %1458 = vrot.lane.b32.xlu0 %v1441, 12
      %v1459 = vpop.permute.xlu0 %1458
      %1460 = vrot.lane.b32.xlu0 %v1442, 12
      %v1461 = vpop.permute.xlu0 %1460
      %1462 = vrot.lane.b32.xlu0 %v1443, 12
      %v1463 = vpop.permute.xlu0 %1462
      %1464 = vrot.lane.b32.xlu0 %v1444, 12
      %v1465 = vpop.permute.xlu0 %1464
      %1466 = vrot.lane.b32.xlu0 %v1445, 12
      %v1467 = vpop.permute.xlu0 %1466
      %1468 = vrot.lane.b32.xlu0 %v1446, 12
      %v1469 = vpop.permute.xlu0 %1468
      %1470 = vrot.lane.b32.xlu0 %v1447, 12
      %v1471 = vpop.permute.xlu0 %1470
      %1472 = vrot.lane.b32.xlu0 %v1448, 12
      %v1473 = vpop.permute.xlu0 %1472
      %1474 = vrot.lane.b32.xlu0 %v1449, 12
      %v1475 = vpop.permute.xlu0 %1474
      %1476 = vrot.lane.b32.xlu0 %v1450, 12
      %v1477 = vpop.permute.xlu0 %1476
      %1478 = vrot.lane.b32.xlu0 %v1451, 12
      %v1479 = vpop.permute.xlu0 %1478
      %1480 = vrot.lane.b32.xlu0 %v1452, 12
      %v1481 = vpop.permute.xlu0 %1480
      %1482 = vrot.lane.b32.xlu0 %v1453, 12
      %v1483 = vpop.permute.xlu0 %1482
      %1484 = vrot.lane.b32.xlu0 %v1454, 12
      %v1485 = vpop.permute.xlu0 %1484
      %1486 = vrot.lane.b32.xlu0 %v1455, 12
      %v1487 = vpop.permute.xlu0 %1486
      %v1504 = vunpack.c.l.b16 %v797
      %v1505 = vunpack.c.l.b16 %v798
      %v1506 = vunpack.c.l.b16 %v799
      %v1507 = vunpack.c.l.b16 %v800
      %v1508 = vunpack.c.l.b16 %v801
      %v1509 = vunpack.c.l.b16 %v802
      %v1510 = vunpack.c.l.b16 %v803
      %v1511 = vunpack.c.l.b16 %v804
      %v1512 = vunpack.c.l.b16 %v805
      %v1513 = vunpack.c.l.b16 %v806
      %v1514 = vunpack.c.l.b16 %v807
      %v1515 = vunpack.c.l.b16 %v808
      %v1516 = vunpack.c.l.b16 %v809
      %v1517 = vunpack.c.l.b16 %v810
      %v1518 = vunpack.c.l.b16 %v811
      %v1519 = vunpack.c.l.b16 %v812
      %v1520 = vpack.c.b16 %v1504, %v1504
      %v1521 = vpack.c.b16 %v1505, %v1505
      %v1522 = vpack.c.b16 %v1506, %v1506
      %v1523 = vpack.c.b16 %v1507, %v1507
      %v1524 = vpack.c.b16 %v1508, %v1508
      %v1525 = vpack.c.b16 %v1509, %v1509
      %v1526 = vpack.c.b16 %v1510, %v1510
      %v1527 = vpack.c.b16 %v1511, %v1511
      %v1528 = vpack.c.b16 %v1512, %v1512
      %v1529 = vpack.c.b16 %v1513, %v1513
      %v1530 = vpack.c.b16 %v1514, %v1514
      %v1531 = vpack.c.b16 %v1515, %v1515
      %v1532 = vpack.c.b16 %v1516, %v1516
      %v1533 = vpack.c.b16 %v1517, %v1517
      %v1534 = vpack.c.b16 %v1518, %v1518
      %v1535 = vpack.c.b16 %v1519, %v1519
      %v1537 = vshrl.u32 %v1440, 16
      %v1539 = vshll.u32 %v1440, 16
      %v1541 = vrot.slane %v1539, 1
      %v1542 = vor.u32 %v1537, %v1541
      %v1544 = vshll.u32 %v1520, 16
      %v1546 = vrot.slane %v1544, 1
      %v1547 = vsel %vm1022, %v1542, %v1546
      %v1549 = vshrl.u32 %v1441, 16
      %v1551 = vshll.u32 %v1441, 16
      %v1553 = vrot.slane %v1551, 1
      %v1554 = vor.u32 %v1549, %v1553
      %v1556 = vshll.u32 %v1521, 16
      %v1558 = vrot.slane %v1556, 1
      %v1559 = vsel %vm1022, %v1554, %v1558
      %v1561 = vshrl.u32 %v1442, 16
      %v1563 = vshll.u32 %v1442, 16
      %v1565 = vrot.slane %v1563, 1
      %v1566 = vor.u32 %v1561, %v1565
      %v1568 = vshll.u32 %v1522, 16
      %v1570 = vrot.slane %v1568, 1
      %v1571 = vsel %vm1022, %v1566, %v1570
      %v1573 = vshrl.u32 %v1443, 16
      %v1575 = vshll.u32 %v1443, 16
      %v1577 = vrot.slane %v1575, 1
      %v1578 = vor.u32 %v1573, %v1577
      %v1580 = vshll.u32 %v1523, 16
      %v1582 = vrot.slane %v1580, 1
      %v1583 = vsel %vm1022, %v1578, %v1582
      %v1585 = vshrl.u32 %v1444, 16
      %v1587 = vshll.u32 %v1444, 16
      %v1589 = vrot.slane %v1587, 1
      %v1590 = vor.u32 %v1585, %v1589
      %v1592 = vshll.u32 %v1524, 16
      %v1594 = vrot.slane %v1592, 1
      %v1595 = vsel %vm1022, %v1590, %v1594
      %v1597 = vshrl.u32 %v1445, 16
      %v1599 = vshll.u32 %v1445, 16
      %v1601 = vrot.slane %v1599, 1
      %v1602 = vor.u32 %v1597, %v1601
      %v1604 = vshll.u32 %v1525, 16
      %v1606 = vrot.slane %v1604, 1
      %v1607 = vsel %vm1022, %v1602, %v1606
      %v1609 = vshrl.u32 %v1446, 16
      %v1611 = vshll.u32 %v1446, 16
      %v1613 = vrot.slane %v1611, 1
      %v1614 = vor.u32 %v1609, %v1613
      %v1616 = vshll.u32 %v1526, 16
      %v1618 = vrot.slane %v1616, 1
      %v1619 = vsel %vm1022, %v1614, %v1618
      %v1621 = vshrl.u32 %v1447, 16
      %v1623 = vshll.u32 %v1447, 16
      %v1625 = vrot.slane %v1623, 1
      %v1626 = vor.u32 %v1621, %v1625
      %v1628 = vshll.u32 %v1527, 16
      %v1630 = vrot.slane %v1628, 1
      %v1631 = vsel %vm1022, %v1626, %v1630
      %v1633 = vshrl.u32 %v1448, 16
      %v1635 = vshll.u32 %v1448, 16
      %v1637 = vrot.slane %v1635, 1
      %v1638 = vor.u32 %v1633, %v1637
      %v1640 = vshll.u32 %v1528, 16
      %v1642 = vrot.slane %v1640, 1
      %v1643 = vsel %vm1022, %v1638, %v1642
      %v1645 = vshrl.u32 %v1449, 16
      %v1647 = vshll.u32 %v1449, 16
      %v1649 = vrot.slane %v1647, 1
      %v1650 = vor.u32 %v1645, %v1649
      %v1652 = vshll.u32 %v1529, 16
      %v1654 = vrot.slane %v1652, 1
      %v1655 = vsel %vm1022, %v1650, %v1654
      %v1657 = vshrl.u32 %v1450, 16
      %v1659 = vshll.u32 %v1450, 16
      %v1661 = vrot.slane %v1659, 1
      %v1662 = vor.u32 %v1657, %v1661
      %v1664 = vshll.u32 %v1530, 16
      %v1666 = vrot.slane %v1664, 1
      %v1667 = vsel %vm1022, %v1662, %v1666
      %v1669 = vshrl.u32 %v1451, 16
      %v1671 = vshll.u32 %v1451, 16
      %v1673 = vrot.slane %v1671, 1
      %v1674 = vor.u32 %v1669, %v1673
      %v1676 = vshll.u32 %v1531, 16
      %v1678 = vrot.slane %v1676, 1
      %v1679 = vsel %vm1022, %v1674, %v1678
      %v1681 = vshrl.u32 %v1452, 16
      %v1683 = vshll.u32 %v1452, 16
      %v1685 = vrot.slane %v1683, 1
      %v1686 = vor.u32 %v1681, %v1685
      %v1688 = vshll.u32 %v1532, 16
      %v1690 = vrot.slane %v1688, 1
      %v1691 = vsel %vm1022, %v1686, %v1690
      %v1693 = vshrl.u32 %v1453, 16
      %v1695 = vshll.u32 %v1453, 16
      %v1697 = vrot.slane %v1695, 1
      %v1698 = vor.u32 %v1693, %v1697
      %v1700 = vshll.u32 %v1533, 16
      %v1702 = vrot.slane %v1700, 1
      %v1703 = vsel %vm1022, %v1698, %v1702
      %v1705 = vshrl.u32 %v1454, 16
      %v1707 = vshll.u32 %v1454, 16
      %v1709 = vrot.slane %v1707, 1
      %v1710 = vor.u32 %v1705, %v1709
      %v1712 = vshll.u32 %v1534, 16
      %v1714 = vrot.slane %v1712, 1
      %v1715 = vsel %vm1022, %v1710, %v1714
      %v1717 = vshrl.u32 %v1455, 16
      %v1719 = vshll.u32 %v1455, 16
      %v1721 = vrot.slane %v1719, 1
      %v1722 = vor.u32 %v1717, %v1721
      %v1724 = vshll.u32 %v1535, 16
      %v1726 = vrot.slane %v1724, 1
      %v1727 = vsel %vm1022, %v1722, %v1726
      %1728 = vrot.lane.b32.xlu0 %v1547, 16
      %v1729 = vpop.permute.xlu0 %1728
      %1730 = vrot.lane.b32.xlu0 %v1559, 16
      %v1731 = vpop.permute.xlu0 %1730
      %1732 = vrot.lane.b32.xlu0 %v1571, 16
      %v1733 = vpop.permute.xlu0 %1732
      %1734 = vrot.lane.b32.xlu0 %v1583, 16
      %v1735 = vpop.permute.xlu0 %1734
      %1736 = vrot.lane.b32.xlu0 %v1595, 16
      %v1737 = vpop.permute.xlu0 %1736
      %1738 = vrot.lane.b32.xlu0 %v1607, 16
      %v1739 = vpop.permute.xlu0 %1738
      %1740 = vrot.lane.b32.xlu0 %v1619, 16
      %v1741 = vpop.permute.xlu0 %1740
      %1742 = vrot.lane.b32.xlu0 %v1631, 16
      %v1743 = vpop.permute.xlu0 %1742
      %1744 = vrot.lane.b32.xlu0 %v1643, 16
      %v1745 = vpop.permute.xlu0 %1744
      %1746 = vrot.lane.b32.xlu0 %v1655, 16
      %v1747 = vpop.permute.xlu0 %1746
      %1748 = vrot.lane.b32.xlu0 %v1667, 16
      %v1749 = vpop.permute.xlu0 %1748
      %1750 = vrot.lane.b32.xlu0 %v1679, 16
      %v1751 = vpop.permute.xlu0 %1750
      %1752 = vrot.lane.b32.xlu0 %v1691, 16
      %v1753 = vpop.permute.xlu0 %1752
      %1754 = vrot.lane.b32.xlu0 %v1703, 16
      %v1755 = vpop.permute.xlu0 %1754
      %1756 = vrot.lane.b32.xlu0 %v1715, 16
      %v1757 = vpop.permute.xlu0 %1756
      %1758 = vrot.lane.b32.xlu0 %v1727, 16
      %v1759 = vpop.permute.xlu0 %1758
      %v1776 = vunpack.c.l.b16 %v813
      %v1777 = vunpack.c.l.b16 %v814
      %v1778 = vunpack.c.l.b16 %v815
      %v1779 = vunpack.c.l.b16 %v816
      %v1780 = vunpack.c.l.b16 %v817
      %v1781 = vunpack.c.l.b16 %v818
      %v1782 = vunpack.c.l.b16 %v819
      %v1783 = vunpack.c.l.b16 %v820
      %v1784 = vunpack.c.l.b16 %v821
      %v1785 = vunpack.c.l.b16 %v822
      %v1786 = vunpack.c.l.b16 %v823
      %v1787 = vunpack.c.l.b16 %v824
      %v1788 = vunpack.c.l.b16 %v825
      %v1789 = vunpack.c.l.b16 %v826
      %v1790 = vunpack.c.l.b16 %v827
      %v1791 = vunpack.c.l.b16 %v828
      %v1792 = vpack.c.b16 %v1409, %v1776
      %v1793 = vpack.c.b16 %v1411, %v1777
      %v1794 = vpack.c.b16 %v1413, %v1778
      %v1795 = vpack.c.b16 %v1415, %v1779
      %v1796 = vpack.c.b16 %v1417, %v1780
      %v1797 = vpack.c.b16 %v1419, %v1781
      %v1798 = vpack.c.b16 %v1421, %v1782
      %v1799 = vpack.c.b16 %v1423, %v1783
      %v1800 = vpack.c.b16 %v1425, %v1784
      %v1801 = vpack.c.b16 %v1427, %v1785
      %v1802 = vpack.c.b16 %v1429, %v1786
      %v1803 = vpack.c.b16 %v1431, %v1787
      %v1804 = vpack.c.b16 %v1433, %v1788
      %v1805 = vpack.c.b16 %v1435, %v1789
      %v1806 = vpack.c.b16 %v1437, %v1790
      %v1807 = vpack.c.b16 %v1439, %v1791
      %v1808 = vrot.slane %v1792, 1
      %v1809 = vrot.slane %v1520, 1
      %v1810 = vsel %vm1295, %v1808, %v1809
      %v1811 = vrot.slane %v1793, 1
      %v1812 = vrot.slane %v1521, 1
      %v1813 = vsel %vm1295, %v1811, %v1812
      %v1814 = vrot.slane %v1794, 1
      %v1815 = vrot.slane %v1522, 1
      %v1816 = vsel %vm1295, %v1814, %v1815
      %v1817 = vrot.slane %v1795, 1
      %v1818 = vrot.slane %v1523, 1
      %v1819 = vsel %vm1295, %v1817, %v1818
      %v1820 = vrot.slane %v1796, 1
      %v1821 = vrot.slane %v1524, 1
      %v1822 = vsel %vm1295, %v1820, %v1821
      %v1823 = vrot.slane %v1797, 1
      %v1824 = vrot.slane %v1525, 1
      %v1825 = vsel %vm1295, %v1823, %v1824
      %v1826 = vrot.slane %v1798, 1
      %v1827 = vrot.slane %v1526, 1
      %v1828 = vsel %vm1295, %v1826, %v1827
      %v1829 = vrot.slane %v1799, 1
      %v1830 = vrot.slane %v1527, 1
      %v1831 = vsel %vm1295, %v1829, %v1830
      %v1832 = vrot.slane %v1800, 1
      %v1833 = vrot.slane %v1528, 1
      %v1834 = vsel %vm1295, %v1832, %v1833
      %v1835 = vrot.slane %v1801, 1
      %v1836 = vrot.slane %v1529, 1
      %v1837 = vsel %vm1295, %v1835, %v1836
      %v1838 = vrot.slane %v1802, 1
      %v1839 = vrot.slane %v1530, 1
      %v1840 = vsel %vm1295, %v1838, %v1839
      %v1841 = vrot.slane %v1803, 1
      %v1842 = vrot.slane %v1531, 1
      %v1843 = vsel %vm1295, %v1841, %v1842
      %v1844 = vrot.slane %v1804, 1
      %v1845 = vrot.slane %v1532, 1
      %v1846 = vsel %vm1295, %v1844, %v1845
      %v1847 = vrot.slane %v1805, 1
      %v1848 = vrot.slane %v1533, 1
      %v1849 = vsel %vm1295, %v1847, %v1848
      %v1850 = vrot.slane %v1806, 1
      %v1851 = vrot.slane %v1534, 1
      %v1852 = vsel %vm1295, %v1850, %v1851
      %v1853 = vrot.slane %v1807, 1
      %v1854 = vrot.slane %v1535, 1
      %v1855 = vsel %vm1295, %v1853, %v1854
      %1856 = vrot.lane.b32.xlu0 %v1810, 20
      %v1857 = vpop.permute.xlu0 %1856
      %1858 = vrot.lane.b32.xlu0 %v1813, 20
      %v1859 = vpop.permute.xlu0 %1858
      %1860 = vrot.lane.b32.xlu0 %v1816, 20
      %v1861 = vpop.permute.xlu0 %1860
      %1862 = vrot.lane.b32.xlu0 %v1819, 20
      %v1863 = vpop.permute.xlu0 %1862
      %1864 = vrot.lane.b32.xlu0 %v1822, 20
      %v1865 = vpop.permute.xlu0 %1864
      %1866 = vrot.lane.b32.xlu0 %v1825, 20
      %v1867 = vpop.permute.xlu0 %1866
      %1868 = vrot.lane.b32.xlu0 %v1828, 20
      %v1869 = vpop.permute.xlu0 %1868
      %1870 = vrot.lane.b32.xlu0 %v1831, 20
      %v1871 = vpop.permute.xlu0 %1870
      %1872 = vrot.lane.b32.xlu0 %v1834, 20
      %v1873 = vpop.permute.xlu0 %1872
      %1874 = vrot.lane.b32.xlu0 %v1837, 20
      %v1875 = vpop.permute.xlu0 %1874
      %1876 = vrot.lane.b32.xlu0 %v1840, 20
      %v1877 = vpop.permute.xlu0 %1876
      %1878 = vrot.lane.b32.xlu0 %v1843, 20
      %v1879 = vpop.permute.xlu0 %1878
      %1880 = vrot.lane.b32.xlu0 %v1846, 20
      %v1881 = vpop.permute.xlu0 %1880
      %1882 = vrot.lane.b32.xlu0 %v1849, 20
      %v1883 = vpop.permute.xlu0 %1882
      %1884 = vrot.lane.b32.xlu0 %v1852, 20
      %v1885 = vpop.permute.xlu0 %1884
      %1886 = vrot.lane.b32.xlu0 %v1855, 20
      %v1887 = vpop.permute.xlu0 %1886
      %v1920 = vunpack.c.l.b16 %v830
      %v1921 = vunpack.c.l.b16 %v831
      %v1922 = vunpack.c.l.b16 %v832
      %v1923 = vunpack.c.l.b16 %v833
      %v1924 = vunpack.c.l.b16 %v834
      %v1925 = vunpack.c.l.b16 %v835
      %v1926 = vunpack.c.l.b16 %v836
      %v1927 = vunpack.c.l.b16 %v837
      %v1928 = vunpack.c.l.b16 %v838
      %v1929 = vunpack.c.l.b16 %v839
      %v1930 = vunpack.c.l.b16 %v840
      %v1931 = vunpack.c.l.b16 %v841
      %v1932 = vunpack.c.l.b16 %v842
      %v1933 = vunpack.c.l.b16 %v843
      %v1934 = vunpack.c.l.b16 %v844
      %v1935 = vunpack.c.l.b16 %v845
      %v1936 = vunpack.c.l.b16 %v846
      %v1937 = vunpack.c.l.b16 %v847
      %v1938 = vunpack.c.l.b16 %v848
      %v1939 = vunpack.c.l.b16 %v849
      %v1940 = vunpack.c.l.b16 %v850
      %v1941 = vunpack.c.l.b16 %v851
      %v1942 = vunpack.c.l.b16 %v852
      %v1943 = vunpack.c.l.b16 %v853
      %v1944 = vunpack.c.l.b16 %v854
      %v1945 = vunpack.c.l.b16 %v855
      %v1946 = vunpack.c.l.b16 %v856
      %v1947 = vunpack.c.l.b16 %v857
      %v1948 = vunpack.c.l.b16 %v858
      %v1949 = vunpack.c.l.b16 %v859
      %v1950 = vunpack.c.l.b16 %v860
      %v1951 = vunpack.c.l.b16 %v861
      %v1952 = vpack.c.b16 %v1921, %v1920
      %v1953 = vpack.c.b16 %v1923, %v1922
      %v1954 = vpack.c.b16 %v1925, %v1924
      %v1955 = vpack.c.b16 %v1927, %v1926
      %v1956 = vpack.c.b16 %v1929, %v1928
      %v1957 = vpack.c.b16 %v1931, %v1930
      %v1958 = vpack.c.b16 %v1933, %v1932
      %v1959 = vpack.c.b16 %v1935, %v1934
      %v1960 = vpack.c.b16 %v1937, %v1936
      %v1961 = vpack.c.b16 %v1939, %v1938
      %v1962 = vpack.c.b16 %v1941, %v1940
      %v1963 = vpack.c.b16 %v1943, %v1942
      %v1964 = vpack.c.b16 %v1945, %v1944
      %v1965 = vpack.c.b16 %v1947, %v1946
      %v1966 = vpack.c.b16 %v1949, %v1948
      %v1967 = vpack.c.b16 %v1951, %v1950
      %1968 = vrot.lane.b32.xlu0 %v1952, 24
      %v1969 = vpop.permute.xlu0 %1968
      %1970 = vrot.lane.b32.xlu0 %v1953, 24
      %v1971 = vpop.permute.xlu0 %1970
      %1972 = vrot.lane.b32.xlu0 %v1954, 24
      %v1973 = vpop.permute.xlu0 %1972
      %1974 = vrot.lane.b32.xlu0 %v1955, 24
      %v1975 = vpop.permute.xlu0 %1974
      %1976 = vrot.lane.b32.xlu0 %v1956, 24
      %v1977 = vpop.permute.xlu0 %1976
      %1978 = vrot.lane.b32.xlu0 %v1957, 24
      %v1979 = vpop.permute.xlu0 %1978
      %1980 = vrot.lane.b32.xlu0 %v1958, 24
      %v1981 = vpop.permute.xlu0 %1980
      %1982 = vrot.lane.b32.xlu0 %v1959, 24
      %v1983 = vpop.permute.xlu0 %1982
      %1984 = vrot.lane.b32.xlu0 %v1960, 24
      %v1985 = vpop.permute.xlu0 %1984
      %1986 = vrot.lane.b32.xlu0 %v1961, 24
      %v1987 = vpop.permute.xlu0 %1986
      %1988 = vrot.lane.b32.xlu0 %v1962, 24
      %v1989 = vpop.permute.xlu0 %1988
      %1990 = vrot.lane.b32.xlu0 %v1963, 24
      %v1991 = vpop.permute.xlu0 %1990
      %1992 = vrot.lane.b32.xlu0 %v1964, 24
      %v1993 = vpop.permute.xlu0 %1992
      %1994 = vrot.lane.b32.xlu0 %v1965, 24
      %v1995 = vpop.permute.xlu0 %1994
      %1996 = vrot.lane.b32.xlu0 %v1966, 24
      %v1997 = vpop.permute.xlu0 %1996
      %1998 = vrot.lane.b32.xlu0 %v1967, 24
      %v1999 = vpop.permute.xlu0 %1998
      %v2016 = vunpack.c.l.b16 %v862
      %v2017 = vunpack.c.l.b16 %v863
      %v2018 = vunpack.c.l.b16 %v864
      %v2019 = vunpack.c.l.b16 %v865
      %v2020 = vunpack.c.l.b16 %v866
      %v2021 = vunpack.c.l.b16 %v867
      %v2022 = vunpack.c.l.b16 %v868
      %v2023 = vunpack.c.l.b16 %v869
      %v2024 = vunpack.c.l.b16 %v870
      %v2025 = vunpack.c.l.b16 %v871
      %v2026 = vunpack.c.l.b16 %v872
      %v2027 = vunpack.c.l.b16 %v873
      %v2028 = vunpack.c.l.b16 %v874
      %v2029 = vunpack.c.l.b16 %v875
      %v2030 = vunpack.c.l.b16 %v876
      %v2031 = vunpack.c.l.b16 %v877
      %v2032 = vpack.c.b16 %v2016, %v2016
      %v2033 = vpack.c.b16 %v2017, %v2017
      %v2034 = vpack.c.b16 %v2018, %v2018
      %v2035 = vpack.c.b16 %v2019, %v2019
      %v2036 = vpack.c.b16 %v2020, %v2020
      %v2037 = vpack.c.b16 %v2021, %v2021
      %v2038 = vpack.c.b16 %v2022, %v2022
      %v2039 = vpack.c.b16 %v2023, %v2023
      %v2040 = vpack.c.b16 %v2024, %v2024
      %v2041 = vpack.c.b16 %v2025, %v2025
      %v2042 = vpack.c.b16 %v2026, %v2026
      %v2043 = vpack.c.b16 %v2027, %v2027
      %v2044 = vpack.c.b16 %v2028, %v2028
      %v2045 = vpack.c.b16 %v2029, %v2029
      %v2046 = vpack.c.b16 %v2030, %v2030
      %v2047 = vpack.c.b16 %v2031, %v2031
      %v2049 = vshrl.u32 %v1952, 16
      %v2051 = vshll.u32 %v1952, 16
      %v2053 = vrot.slane %v2051, 1
      %v2054 = vor.u32 %v2049, %v2053
      %v2056 = vshll.u32 %v2032, 16
      %v2058 = vrot.slane %v2056, 1
      %v2059 = vsel %vm1022, %v2054, %v2058
      %v2061 = vshrl.u32 %v1953, 16
      %v2063 = vshll.u32 %v1953, 16
      %v2065 = vrot.slane %v2063, 1
      %v2066 = vor.u32 %v2061, %v2065
      %v2068 = vshll.u32 %v2033, 16
      %v2070 = vrot.slane %v2068, 1
      %v2071 = vsel %vm1022, %v2066, %v2070
      %v2073 = vshrl.u32 %v1954, 16
      %v2075 = vshll.u32 %v1954, 16
      %v2077 = vrot.slane %v2075, 1
      %v2078 = vor.u32 %v2073, %v2077
      %v2080 = vshll.u32 %v2034, 16
      %v2082 = vrot.slane %v2080, 1
      %v2083 = vsel %vm1022, %v2078, %v2082
      %v2085 = vshrl.u32 %v1955, 16
      %v2087 = vshll.u32 %v1955, 16
      %v2089 = vrot.slane %v2087, 1
      %v2090 = vor.u32 %v2085, %v2089
      %v2092 = vshll.u32 %v2035, 16
      %v2094 = vrot.slane %v2092, 1
      %v2095 = vsel %vm1022, %v2090, %v2094
      %v2097 = vshrl.u32 %v1956, 16
      %v2099 = vshll.u32 %v1956, 16
      %v2101 = vrot.slane %v2099, 1
      %v2102 = vor.u32 %v2097, %v2101
      %v2104 = vshll.u32 %v2036, 16
      %v2106 = vrot.slane %v2104, 1
      %v2107 = vsel %vm1022, %v2102, %v2106
      %v2109 = vshrl.u32 %v1957, 16
      %v2111 = vshll.u32 %v1957, 16
      %v2113 = vrot.slane %v2111, 1
      %v2114 = vor.u32 %v2109, %v2113
      %v2116 = vshll.u32 %v2037, 16
      %v2118 = vrot.slane %v2116, 1
      %v2119 = vsel %vm1022, %v2114, %v2118
      %v2121 = vshrl.u32 %v1958, 16
      %v2123 = vshll.u32 %v1958, 16
      %v2125 = vrot.slane %v2123, 1
      %v2126 = vor.u32 %v2121, %v2125
      %v2128 = vshll.u32 %v2038, 16
      %v2130 = vrot.slane %v2128, 1
      %v2131 = vsel %vm1022, %v2126, %v2130
      %v2133 = vshrl.u32 %v1959, 16
      %v2135 = vshll.u32 %v1959, 16
      %v2137 = vrot.slane %v2135, 1
      %v2138 = vor.u32 %v2133, %v2137
      %v2140 = vshll.u32 %v2039, 16
      %v2142 = vrot.slane %v2140, 1
      %v2143 = vsel %vm1022, %v2138, %v2142
      %v2145 = vshrl.u32 %v1960, 16
      %v2147 = vshll.u32 %v1960, 16
      %v2149 = vrot.slane %v2147, 1
      %v2150 = vor.u32 %v2145, %v2149
      %v2152 = vshll.u32 %v2040, 16
      %v2154 = vrot.slane %v2152, 1
      %v2155 = vsel %vm1022, %v2150, %v2154
      %v2157 = vshrl.u32 %v1961, 16
      %v2159 = vshll.u32 %v1961, 16
      %v2161 = vrot.slane %v2159, 1
      %v2162 = vor.u32 %v2157, %v2161
      %v2164 = vshll.u32 %v2041, 16
      %v2166 = vrot.slane %v2164, 1
      %v2167 = vsel %vm1022, %v2162, %v2166
      %v2169 = vshrl.u32 %v1962, 16
      %v2171 = vshll.u32 %v1962, 16
      %v2173 = vrot.slane %v2171, 1
      %v2174 = vor.u32 %v2169, %v2173
      %v2176 = vshll.u32 %v2042, 16
      %v2178 = vrot.slane %v2176, 1
      %v2179 = vsel %vm1022, %v2174, %v2178
      %v2181 = vshrl.u32 %v1963, 16
      %v2183 = vshll.u32 %v1963, 16
      %v2185 = vrot.slane %v2183, 1
      %v2186 = vor.u32 %v2181, %v2185
      %v2188 = vshll.u32 %v2043, 16
      %v2190 = vrot.slane %v2188, 1
      %v2191 = vsel %vm1022, %v2186, %v2190
      %v2193 = vshrl.u32 %v1964, 16
      %v2195 = vshll.u32 %v1964, 16
      %v2197 = vrot.slane %v2195, 1
      %v2198 = vor.u32 %v2193, %v2197
      %v2200 = vshll.u32 %v2044, 16
      %v2202 = vrot.slane %v2200, 1
      %v2203 = vsel %vm1022, %v2198, %v2202
      %v2205 = vshrl.u32 %v1965, 16
      %v2207 = vshll.u32 %v1965, 16
      %v2209 = vrot.slane %v2207, 1
      %v2210 = vor.u32 %v2205, %v2209
      %v2212 = vshll.u32 %v2045, 16
      %v2214 = vrot.slane %v2212, 1
      %v2215 = vsel %vm1022, %v2210, %v2214
      %v2217 = vshrl.u32 %v1966, 16
      %v2219 = vshll.u32 %v1966, 16
      %v2221 = vrot.slane %v2219, 1
      %v2222 = vor.u32 %v2217, %v2221
      %v2224 = vshll.u32 %v2046, 16
      %v2226 = vrot.slane %v2224, 1
      %v2227 = vsel %vm1022, %v2222, %v2226
      %v2229 = vshrl.u32 %v1967, 16
      %v2231 = vshll.u32 %v1967, 16
      %v2233 = vrot.slane %v2231, 1
      %v2234 = vor.u32 %v2229, %v2233
      %v2236 = vshll.u32 %v2047, 16
      %v2238 = vrot.slane %v2236, 1
      %v2239 = vsel %vm1022, %v2234, %v2238
      %2240 = vrot.lane.b32.xlu0 %v2059, 28
      %v2241 = vpop.permute.xlu0 %2240
      %2242 = vrot.lane.b32.xlu0 %v2071, 28
      %v2243 = vpop.permute.xlu0 %2242
      %2244 = vrot.lane.b32.xlu0 %v2083, 28
      %v2245 = vpop.permute.xlu0 %2244
      %2246 = vrot.lane.b32.xlu0 %v2095, 28
      %v2247 = vpop.permute.xlu0 %2246
      %2248 = vrot.lane.b32.xlu0 %v2107, 28
      %v2249 = vpop.permute.xlu0 %2248
      %2250 = vrot.lane.b32.xlu0 %v2119, 28
      %v2251 = vpop.permute.xlu0 %2250
      %2252 = vrot.lane.b32.xlu0 %v2131, 28
      %v2253 = vpop.permute.xlu0 %2252
      %2254 = vrot.lane.b32.xlu0 %v2143, 28
      %v2255 = vpop.permute.xlu0 %2254
      %2256 = vrot.lane.b32.xlu0 %v2155, 28
      %v2257 = vpop.permute.xlu0 %2256
      %2258 = vrot.lane.b32.xlu0 %v2167, 28
      %v2259 = vpop.permute.xlu0 %2258
      %2260 = vrot.lane.b32.xlu0 %v2179, 28
      %v2261 = vpop.permute.xlu0 %2260
      %2262 = vrot.lane.b32.xlu0 %v2191, 28
      %v2263 = vpop.permute.xlu0 %2262
      %2264 = vrot.lane.b32.xlu0 %v2203, 28
      %v2265 = vpop.permute.xlu0 %2264
      %2266 = vrot.lane.b32.xlu0 %v2215, 28
      %v2267 = vpop.permute.xlu0 %2266
      %2268 = vrot.lane.b32.xlu0 %v2227, 28
      %v2269 = vpop.permute.xlu0 %2268
      %2270 = vrot.lane.b32.xlu0 %v2239, 28
      %v2271 = vpop.permute.xlu0 %2270
      %v2288 = vunpack.c.l.b16 %v878
      %v2289 = vunpack.c.l.b16 %v879
      %v2290 = vunpack.c.l.b16 %v880
      %v2291 = vunpack.c.l.b16 %v881
      %v2292 = vunpack.c.l.b16 %v882
      %v2293 = vunpack.c.l.b16 %v883
      %v2294 = vunpack.c.l.b16 %v884
      %v2295 = vunpack.c.l.b16 %v885
      %v2296 = vunpack.c.l.b16 %v886
      %v2297 = vunpack.c.l.b16 %v887
      %v2298 = vunpack.c.l.b16 %v888
      %v2299 = vunpack.c.l.b16 %v889
      %v2300 = vunpack.c.l.b16 %v890
      %v2301 = vunpack.c.l.b16 %v891
      %v2302 = vunpack.c.l.b16 %v892
      %v2303 = vunpack.c.l.b16 %v893
      %v2304 = vpack.c.b16 %v1921, %v2288
      %v2305 = vpack.c.b16 %v1923, %v2289
      %v2306 = vpack.c.b16 %v1925, %v2290
      %v2307 = vpack.c.b16 %v1927, %v2291
      %v2308 = vpack.c.b16 %v1929, %v2292
      %v2309 = vpack.c.b16 %v1931, %v2293
      %v2310 = vpack.c.b16 %v1933, %v2294
      %v2311 = vpack.c.b16 %v1935, %v2295
      %v2312 = vpack.c.b16 %v1937, %v2296
      %v2313 = vpack.c.b16 %v1939, %v2297
      %v2314 = vpack.c.b16 %v1941, %v2298
      %v2315 = vpack.c.b16 %v1943, %v2299
      %v2316 = vpack.c.b16 %v1945, %v2300
      %v2317 = vpack.c.b16 %v1947, %v2301
      %v2318 = vpack.c.b16 %v1949, %v2302
      %v2319 = vpack.c.b16 %v1951, %v2303
      %v2320 = vrot.slane %v2304, 1
      %v2321 = vrot.slane %v2032, 1
      %v2322 = vsel %vm1295, %v2320, %v2321
      %v2323 = vrot.slane %v2305, 1
      %v2324 = vrot.slane %v2033, 1
      %v2325 = vsel %vm1295, %v2323, %v2324
      %v2326 = vrot.slane %v2306, 1
      %v2327 = vrot.slane %v2034, 1
      %v2328 = vsel %vm1295, %v2326, %v2327
      %v2329 = vrot.slane %v2307, 1
      %v2330 = vrot.slane %v2035, 1
      %v2331 = vsel %vm1295, %v2329, %v2330
      %v2332 = vrot.slane %v2308, 1
      %v2333 = vrot.slane %v2036, 1
      %v2334 = vsel %vm1295, %v2332, %v2333
      %v2335 = vrot.slane %v2309, 1
      %v2336 = vrot.slane %v2037, 1
      %v2337 = vsel %vm1295, %v2335, %v2336
      %v2338 = vrot.slane %v2310, 1
      %v2339 = vrot.slane %v2038, 1
      %v2340 = vsel %vm1295, %v2338, %v2339
      %v2341 = vrot.slane %v2311, 1
      %v2342 = vrot.slane %v2039, 1
      %v2343 = vsel %vm1295, %v2341, %v2342
      %v2344 = vrot.slane %v2312, 1
      %v2345 = vrot.slane %v2040, 1
      %v2346 = vsel %vm1295, %v2344, %v2345
      %v2347 = vrot.slane %v2313, 1
      %v2348 = vrot.slane %v2041, 1
      %v2349 = vsel %vm1295, %v2347, %v2348
      %v2350 = vrot.slane %v2314, 1
      %v2351 = vrot.slane %v2042, 1
      %v2352 = vsel %vm1295, %v2350, %v2351
      %v2353 = vrot.slane %v2315, 1
      %v2354 = vrot.slane %v2043, 1
      %v2355 = vsel %vm1295, %v2353, %v2354
      %v2356 = vrot.slane %v2316, 1
      %v2357 = vrot.slane %v2044, 1
      %v2358 = vsel %vm1295, %v2356, %v2357
      %v2359 = vrot.slane %v2317, 1
      %v2360 = vrot.slane %v2045, 1
      %v2361 = vsel %vm1295, %v2359, %v2360
      %v2362 = vrot.slane %v2318, 1
      %v2363 = vrot.slane %v2046, 1
      %v2364 = vsel %vm1295, %v2362, %v2363
      %v2365 = vrot.slane %v2319, 1
      %v2366 = vrot.slane %v2047, 1
      %v2367 = vsel %vm1295, %v2365, %v2366
      %2368 = vrot.lane.b32.xlu0 %v2322, 32
      %v2369 = vpop.permute.xlu0 %2368
      %2370 = vrot.lane.b32.xlu0 %v2325, 32
      %v2371 = vpop.permute.xlu0 %2370
      %2372 = vrot.lane.b32.xlu0 %v2328, 32
      %v2373 = vpop.permute.xlu0 %2372
      %2374 = vrot.lane.b32.xlu0 %v2331, 32
      %v2375 = vpop.permute.xlu0 %2374
      %2376 = vrot.lane.b32.xlu0 %v2334, 32
      %v2377 = vpop.permute.xlu0 %2376
      %2378 = vrot.lane.b32.xlu0 %v2337, 32
      %v2379 = vpop.permute.xlu0 %2378
      %2380 = vrot.lane.b32.xlu0 %v2340, 32
      %v2381 = vpop.permute.xlu0 %2380
      %2382 = vrot.lane.b32.xlu0 %v2343, 32
      %v2383 = vpop.permute.xlu0 %2382
      %2384 = vrot.lane.b32.xlu0 %v2346, 32
      %v2385 = vpop.permute.xlu0 %2384
      %2386 = vrot.lane.b32.xlu0 %v2349, 32
      %v2387 = vpop.permute.xlu0 %2386
      %2388 = vrot.lane.b32.xlu0 %v2352, 32
      %v2389 = vpop.permute.xlu0 %2388
      %2390 = vrot.lane.b32.xlu0 %v2355, 32
      %v2391 = vpop.permute.xlu0 %2390
      %2392 = vrot.lane.b32.xlu0 %v2358, 32
      %v2393 = vpop.permute.xlu0 %2392
      %2394 = vrot.lane.b32.xlu0 %v2361, 32
      %v2395 = vpop.permute.xlu0 %2394
      %2396 = vrot.lane.b32.xlu0 %v2364, 32
      %v2397 = vpop.permute.xlu0 %2396
      %2398 = vrot.lane.b32.xlu0 %v2367, 32
      %v2399 = vpop.permute.xlu0 %2398
      %vm2400 = vcmask 31744
      %v2402 = vsel %vm2400, %v958, %v1216
      %v2404 = vsel %vm2400, %v959, %v1218
      %v2406 = vsel %vm2400, %v960, %v1220
      %v2408 = vsel %vm2400, %v961, %v1222
      %v2410 = vsel %vm2400, %v962, %v1224
      %v2412 = vsel %vm2400, %v963, %v1226
      %v2414 = vsel %vm2400, %v964, %v1228
      %v2416 = vsel %vm2400, %v965, %v1230
      %v2418 = vsel %vm2400, %v966, %v1232
      %v2420 = vsel %vm2400, %v967, %v1234
      %v2422 = vsel %vm2400, %v968, %v1236
      %v2424 = vsel %vm2400, %v969, %v1238
      %v2426 = vsel %vm2400, %v970, %v1240
      %v2428 = vsel %vm2400, %v971, %v1242
      %v2430 = vsel %vm2400, %v972, %v1244
      %v2432 = vsel %vm2400, %v973, %v1246
      %vm2433 = vcmask 64512
      %v2435 = vsel %vm2433, %v2402, %v1345
      %v2437 = vsel %vm2433, %v2404, %v1347
      %v2439 = vsel %vm2433, %v2406, %v1349
      %v2441 = vsel %vm2433, %v2408, %v1351
      %v2443 = vsel %vm2433, %v2410, %v1353
      %v2445 = vsel %vm2433, %v2412, %v1355
      %v2447 = vsel %vm2433, %v2414, %v1357
      %v2449 = vsel %vm2433, %v2416, %v1359
      %v2451 = vsel %vm2433, %v2418, %v1361
      %v2453 = vsel %vm2433, %v2420, %v1363
      %v2455 = vsel %vm2433, %v2422, %v1365
      %v2457 = vsel %vm2433, %v2424, %v1367
      %v2459 = vsel %vm2433, %v2426, %v1369
      %v2461 = vsel %vm2433, %v2428, %v1371
      %v2463 = vsel %vm2433, %v2430, %v1373
      %v2465 = vsel %vm2433, %v2432, %v1375
      %vm2466 = vcmask 97280
      %v2468 = vsel %vm2466, %v2435, %v1457
      %v2470 = vsel %vm2466, %v2437, %v1459
      %v2472 = vsel %vm2466, %v2439, %v1461
      %v2474 = vsel %vm2466, %v2441, %v1463
      %v2476 = vsel %vm2466, %v2443, %v1465
      %v2478 = vsel %vm2466, %v2445, %v1467
      %v2480 = vsel %vm2466, %v2447, %v1469
      %v2482 = vsel %vm2466, %v2449, %v1471
      %v2484 = vsel %vm2466, %v2451, %v1473
      %v2486 = vsel %vm2466, %v2453, %v1475
      %v2488 = vsel %vm2466, %v2455, %v1477
      %v2490 = vsel %vm2466, %v2457, %v1479
      %v2492 = vsel %vm2466, %v2459, %v1481
      %v2494 = vsel %vm2466, %v2461, %v1483
      %v2496 = vsel %vm2466, %v2463, %v1485
      %v2498 = vsel %vm2466, %v2465, %v1487
      %vm2499 = vcmask 130048
      %v2501 = vsel %vm2499, %v2468, %v1729
      %v2503 = vsel %vm2499, %v2470, %v1731
      %v2505 = vsel %vm2499, %v2472, %v1733
      %v2507 = vsel %vm2499, %v2474, %v1735
      %v2509 = vsel %vm2499, %v2476, %v1737
      %v2511 = vsel %vm2499, %v2478, %v1739
      %v2513 = vsel %vm2499, %v2480, %v1741
      %v2515 = vsel %vm2499, %v2482, %v1743
      %v2517 = vsel %vm2499, %v2484, %v1745
      %v2519 = vsel %vm2499, %v2486, %v1747
      %v2521 = vsel %vm2499, %v2488, %v1749
      %v2523 = vsel %vm2499, %v2490, %v1751
      %v2525 = vsel %vm2499, %v2492, %v1753
      %v2527 = vsel %vm2499, %v2494, %v1755
      %v2529 = vsel %vm2499, %v2496, %v1757
      %v2531 = vsel %vm2499, %v2498, %v1759
      %vm2532 = vcmask 162816
      %v2534 = vsel %vm2532, %v2501, %v1857
      %v2536 = vsel %vm2532, %v2503, %v1859
      %v2538 = vsel %vm2532, %v2505, %v1861
      %v2540 = vsel %vm2532, %v2507, %v1863
      %v2542 = vsel %vm2532, %v2509, %v1865
      %v2544 = vsel %vm2532, %v2511, %v1867
      %v2546 = vsel %vm2532, %v2513, %v1869
      %v2548 = vsel %vm2532, %v2515, %v1871
      %v2550 = vsel %vm2532, %v2517, %v1873
      %v2552 = vsel %vm2532, %v2519, %v1875
      %v2554 = vsel %vm2532, %v2521, %v1877
      %v2556 = vsel %vm2532, %v2523, %v1879
      %v2558 = vsel %vm2532, %v2525, %v1881
      %v2560 = vsel %vm2532, %v2527, %v1883
      %v2562 = vsel %vm2532, %v2529, %v1885
      %v2564 = vsel %vm2532, %v2531, %v1887
      %vm2565 = vcmask 195584
      %v2567 = vsel %vm2565, %v2534, %v1969
      %v2569 = vsel %vm2565, %v2536, %v1971
      %v2571 = vsel %vm2565, %v2538, %v1973
      %v2573 = vsel %vm2565, %v2540, %v1975
      %v2575 = vsel %vm2565, %v2542, %v1977
      %v2577 = vsel %vm2565, %v2544, %v1979
      %v2579 = vsel %vm2565, %v2546, %v1981
      %v2581 = vsel %vm2565, %v2548, %v1983
      %v2583 = vsel %vm2565, %v2550, %v1985
      %v2585 = vsel %vm2565, %v2552, %v1987
      %v2587 = vsel %vm2565, %v2554, %v1989
      %v2589 = vsel %vm2565, %v2556, %v1991
      %v2591 = vsel %vm2565, %v2558, %v1993
      %v2593 = vsel %vm2565, %v2560, %v1995
      %v2595 = vsel %vm2565, %v2562, %v1997
      %v2597 = vsel %vm2565, %v2564, %v1999
      %vm2598 = vcmask 228352
      %v2600 = vsel %vm2598, %v2567, %v2241
      %v2602 = vsel %vm2598, %v2569, %v2243
      %v2604 = vsel %vm2598, %v2571, %v2245
      %v2606 = vsel %vm2598, %v2573, %v2247
      %v2608 = vsel %vm2598, %v2575, %v2249
      %v2610 = vsel %vm2598, %v2577, %v2251
      %v2612 = vsel %vm2598, %v2579, %v2253
      %v2614 = vsel %vm2598, %v2581, %v2255
      %v2616 = vsel %vm2598, %v2583, %v2257
      %v2618 = vsel %vm2598, %v2585, %v2259
      %v2620 = vsel %vm2598, %v2587, %v2261
      %v2622 = vsel %vm2598, %v2589, %v2263
      %v2624 = vsel %vm2598, %v2591, %v2265
      %v2626 = vsel %vm2598, %v2593, %v2267
      %v2628 = vsel %vm2598, %v2595, %v2269
      %v2630 = vsel %vm2598, %v2597, %v2271
      %vm2631 = vcmask 261120
      %v2633 = vsel %vm2631, %v2600, %v2369
      %v2635 = vsel %vm2631, %v2602, %v2371
      %v2637 = vsel %vm2631, %v2604, %v2373
      %v2639 = vsel %vm2631, %v2606, %v2375
      %v2641 = vsel %vm2631, %v2608, %v2377
      %v2643 = vsel %vm2631, %v2610, %v2379
      %v2645 = vsel %vm2631, %v2612, %v2381
      %v2647 = vsel %vm2631, %v2614, %v2383
      %v2649 = vsel %vm2631, %v2616, %v2385
      %v2651 = vsel %vm2631, %v2618, %v2387
      %v2653 = vsel %vm2631, %v2620, %v2389
      %v2655 = vsel %vm2631, %v2622, %v2391
      %v2657 = vsel %vm2631, %v2624, %v2393
      %v2659 = vsel %vm2631, %v2626, %v2395
      %v2661 = vsel %vm2631, %v2628, %v2397
      %v2663 = vsel %vm2631, %v2630, %v2399
      %v2664 = vld [vmem:[%s1] sm:$0xf]
      %v2665 = vld [vmem:[%s1 + $0x4] sm:$0xf]
      %v2666 = vld [vmem:[%s1 + $0x8] sm:$0xf]
      %v2667 = vld [vmem:[%s1 + $0xc] sm:$0xf]
      %v2668 = vld [vmem:[%s1 + $0x10] sm:$0x3]
      %v2669 = vld [vmem:[%s2] sm:$0x1]
      %v2671 = vlaneseq
      %v2672 = vshrl.u32 %v2671, 7
      %v2673 = vsub.s32 0, %v2672
      %v2674 = vrot.slane %v2669, %v2673
      %v2681 = vunpack.c.l.b16 %v2664
      %v2682 = vunpack.c.l.b16 %v2665
      %v2683 = vunpack.c.l.b16 %v2666
      %v2684 = vunpack.c.l.b16 %v2667
      %v2685 = vunpack.c.l.b16 %v2668
      %v2686 = vpack.c.b16 %v2682, %v2681
      %v2687 = vpack.c.b16 %v2684, %v2683
      %v2688 = vpack.c.b16 %v2685, %v2685
      %vm2691 = vcmask 293888
      %v2692 = vsel %vm2691, %v2633, 0
      %v2694 = vsel %vm2691, %v2635, 0
      %v2696 = vsel %vm2691, %v2637, 0
      %v2698 = vsel %vm2691, %v2639, 0
      %v2700 = vsel %vm2691, %v2641, 0
      %v2702 = vsel %vm2691, %v2643, 0
      %v2704 = vsel %vm2691, %v2645, 0
      %v2706 = vsel %vm2691, %v2647, 0
      %v2708 = vsel %vm2691, %v2649, 0
      %v2710 = vsel %vm2691, %v2651, 0
      %v2712 = vsel %vm2691, %v2653, 0
      %v2714 = vsel %vm2691, %v2655, 0
      %v2716 = vsel %vm2691, %v2657, 0
      %v2718 = vsel %vm2691, %v2659, 0
      %v2720 = vsel %vm2691, %v2661, 0
      %v2722 = vsel %vm2691, %v2663, 0
      %vm2724 = vcmask 1041408
      %v2726 = vsel %vm2724, %v2688, 0
      %2728 = vmatprep.subr.bf16.mxu0 0
      %2729 = vmatpush1.bf16.msra.mxu0 0
      %2730 = vmatprep.subr.bf16.mxu0 0
      %2731 = vmatpush1.bf16.msra.mxu0 0
      %2732 = vmatprep.subr.bf16.mxu0 0
      %2733 = vmatpush1.bf16.msra.mxu0 0
      %2734 = vmatprep.subr.bf16.mxu0 0
      %2735 = vmatpush1.bf16.msra.mxu0 0
      %2736 = vmatprep.subr.bf16.mxu0 0
      %2737 = vmatpush1.bf16.msra.mxu0 0
      %2738 = vmatprep.subr.bf16.mxu0 0
      %2739 = vmatpush1.bf16.msra.mxu0 %v2726
      %2740 = vmatprep.subr.bf16.mxu0 0
      %2741 = vmatpush1.bf16.msra.mxu0 %v2687
      %2742 = vmatprep.subr.bf16.mxu0 0
      %2743 = vmatpush1.bf16.msra.mxu0 %v2686
      %2744 = vmatprep.subr.bf16.mxu0 0
      %2745 = vmatpush2.bf16.msra.mxu0 0
      %2746 = vmatprep.subr.bf16.mxu0 0
      %2747 = vmatpush2.bf16.msra.mxu0 0
      %2748 = vmatprep.subr.bf16.mxu0 0
      %2749 = vmatpush2.bf16.msra.mxu0 0
      %2750 = vmatprep.subr.bf16.mxu0 0
      %2751 = vmatpush2.bf16.msra.mxu0 0
      %2752 = vmatprep.subr.bf16.mxu0 0
      %2753 = vmatpush2.bf16.msra.mxu0 0
      %2754 = vmatprep.subr.bf16.mxu0 0
      %2755 = vmatpush2.bf16.msra.mxu0 0
      %2756 = vmatprep.subr.bf16.mxu0 0
      %2757 = vmatpush2.bf16.msra.mxu0 0
      %2758 = vmatprep.subr.bf16.mxu0 0
      %2759 = vmatpush2.bf16.msra.mxu0 0
      %2760 = vmatprep.mubr.bf16.mxu0 0
      %2761 = vmatmul.mubr.bf16.gmra.mxu0 %v2692
      %v2762 = vpop.f32.mrf.mxu0
      %v2763 = vadd.f32 %v2674, %v2762
      %v2764 = vpop.f32.mrf.mxu0
      %v2765 = vpop.f32.mrf.mxu0
      %v2766 = vadd.f32 %v2674, %v2765
      %v2767 = vpop.f32.mrf.mxu0
      %2768 = vmatprep.mubr.bf16.mxu0 0
      %2769 = vmatmul.mubr.bf16.gmra.mxu0 %v2694
      %v2770 = vpop.f32.mrf.mxu0
      %v2771 = vadd.f32 %v2674, %v2770
      %v2772 = vpop.f32.mrf.mxu0
      %v2773 = vpop.f32.mrf.mxu0
      %v2774 = vadd.f32 %v2674, %v2773
      %v2775 = vpop.f32.mrf.mxu0
      %2776 = vmatprep.mubr.bf16.mxu0 0
      %2777 = vmatmul.mubr.bf16.gmra.mxu0 %v2696
      %v2778 = vpop.f32.mrf.mxu0
      %v2779 = vadd.f32 %v2674, %v2778
      %v2780 = vpop.f32.mrf.mxu0
      %v2781 = vpop.f32.mrf.mxu0
      %v2782 = vadd.f32 %v2674, %v2781
      %v2783 = vpop.f32.mrf.mxu0
      %2784 = vmatprep.mubr.bf16.mxu0 0
      %2785 = vmatmul.mubr.bf16.gmra.mxu0 %v2698
      %v2786 = vpop.f32.mrf.mxu0
      %v2787 = vadd.f32 %v2674, %v2786
      %v2788 = vpop.f32.mrf.mxu0
      %v2789 = vpop.f32.mrf.mxu0
      %v2790 = vadd.f32 %v2674, %v2789
      %v2791 = vpop.f32.mrf.mxu0
      %2792 = vmatprep.mubr.bf16.mxu0 0
      %2793 = vmatmul.mubr.bf16.gmra.mxu0 %v2700
      %v2794 = vpop.f32.mrf.mxu0
      %v2795 = vadd.f32 %v2674, %v2794
      %v2796 = vpop.f32.mrf.mxu0
      %v2797 = vpop.f32.mrf.mxu0
      %v2798 = vadd.f32 %v2674, %v2797
      %v2799 = vpop.f32.mrf.mxu0
      %2800 = vmatprep.mubr.bf16.mxu0 0
      %2801 = vmatmul.mubr.bf16.gmra.mxu0 %v2702
      %v2802 = vpop.f32.mrf.mxu0
      %v2803 = vadd.f32 %v2674, %v2802
      %v2804 = vpop.f32.mrf.mxu0
      %v2805 = vpop.f32.mrf.mxu0
      %v2806 = vadd.f32 %v2674, %v2805
      %v2807 = vpop.f32.mrf.mxu0
      %2808 = vmatprep.mubr.bf16.mxu0 0
      %2809 = vmatmul.mubr.bf16.gmra.mxu0 %v2704
      %v2810 = vpop.f32.mrf.mxu0
      %v2811 = vadd.f32 %v2674, %v2810
      %v2812 = vpop.f32.mrf.mxu0
      %v2813 = vpop.f32.mrf.mxu0
      %v2814 = vadd.f32 %v2674, %v2813
      %v2815 = vpop.f32.mrf.mxu0
      %2816 = vmatprep.mubr.bf16.mxu0 0
      %2817 = vmatmul.mubr.bf16.gmra.mxu0 %v2706
      %v2818 = vpop.f32.mrf.mxu0
      %v2819 = vadd.f32 %v2674, %v2818
      %v2820 = vpop.f32.mrf.mxu0
      %v2821 = vpop.f32.mrf.mxu0
      %v2822 = vadd.f32 %v2674, %v2821
      %v2823 = vpop.f32.mrf.mxu0
      %2824 = vmatprep.mubr.bf16.mxu0 0
      %2825 = vmatmul.mubr.bf16.gmra.mxu0 %v2708
      %v2826 = vpop.f32.mrf.mxu0
      %v2827 = vadd.f32 %v2674, %v2826
      %v2828 = vpop.f32.mrf.mxu0
      %v2829 = vpop.f32.mrf.mxu0
      %v2830 = vadd.f32 %v2674, %v2829
      %v2831 = vpop.f32.mrf.mxu0
      %2832 = vmatprep.mubr.bf16.mxu0 0
      %2833 = vmatmul.mubr.bf16.gmra.mxu0 %v2710
      %v2834 = vpop.f32.mrf.mxu0
      %v2835 = vadd.f32 %v2674, %v2834
      %v2836 = vpop.f32.mrf.mxu0
      %v2837 = vpop.f32.mrf.mxu0
      %v2838 = vadd.f32 %v2674, %v2837
      %v2839 = vpop.f32.mrf.mxu0
      %2840 = vmatprep.mubr.bf16.mxu0 0
      %2841 = vmatmul.mubr.bf16.gmra.mxu0 %v2712
      %v2842 = vpop.f32.mrf.mxu0
      %v2843 = vadd.f32 %v2674, %v2842
      %v2844 = vpop.f32.mrf.mxu0
      %v2845 = vpop.f32.mrf.mxu0
      %v2846 = vadd.f32 %v2674, %v2845
      %v2847 = vpop.f32.mrf.mxu0
      %2848 = vmatprep.mubr.bf16.mxu0 0
      %2849 = vmatmul.mubr.bf16.gmra.mxu0 %v2714
      %v2850 = vpop.f32.mrf.mxu0
      %v2851 = vadd.f32 %v2674, %v2850
      %v2852 = vpop.f32.mrf.mxu0
      %v2853 = vpop.f32.mrf.mxu0
      %v2854 = vadd.f32 %v2674, %v2853
      %v2855 = vpop.f32.mrf.mxu0
      %2856 = vmatprep.mubr.bf16.mxu0 0
      %2857 = vmatmul.mubr.bf16.gmra.mxu0 %v2716
      %v2858 = vpop.f32.mrf.mxu0
      %v2859 = vadd.f32 %v2674, %v2858
      %v2860 = vpop.f32.mrf.mxu0
      %v2861 = vpop.f32.mrf.mxu0
      %v2862 = vadd.f32 %v2674, %v2861
      %v2863 = vpop.f32.mrf.mxu0
      %2864 = vmatprep.mubr.bf16.mxu0 0
      %2865 = vmatmul.mubr.bf16.gmra.mxu0 %v2718
      %v2866 = vpop.f32.mrf.mxu0
      %v2867 = vadd.f32 %v2674, %v2866
      %v2868 = vpop.f32.mrf.mxu0
      %v2869 = vpop.f32.mrf.mxu0
      %v2870 = vadd.f32 %v2674, %v2869
      %v2871 = vpop.f32.mrf.mxu0
      %2872 = vmatprep.mubr.bf16.mxu0 0
      %2873 = vmatmul.mubr.bf16.gmra.mxu0 %v2720
      %v2874 = vpop.f32.mrf.mxu0
      %v2875 = vadd.f32 %v2674, %v2874
      %v2876 = vpop.f32.mrf.mxu0
      %v2877 = vpop.f32.mrf.mxu0
      %v2878 = vadd.f32 %v2674, %v2877
      %v2879 = vpop.f32.mrf.mxu0
      %2880 = vmatprep.mubr.bf16.mxu0 0
      %2881 = vmatmul.mubr.bf16.gmra.mxu0 %v2722
      %v2882 = vpop.f32.mrf.mxu0
      %v2883 = vadd.f32 %v2674, %v2882
      %v2884 = vpop.f32.mrf.mxu0
      %v2885 = vpop.f32.mrf.mxu0
      %v2886 = vadd.f32 %v2674, %v2885
      %v2887 = vpop.f32.mrf.mxu0
      %2888 = vdwg.mxu0
      %v2889 = vmax.f32 %v2763, 0.0
      %v2890 = vmax.f32 %v2766, 0.0
      %v2891 = vmax.f32 %v2771, 0.0
      %v2892 = vmax.f32 %v2774, 0.0
      %v2893 = vmax.f32 %v2779, 0.0
      %v2894 = vmax.f32 %v2782, 0.0
      %v2895 = vmax.f32 %v2787, 0.0
      %v2896 = vmax.f32 %v2790, 0.0
      %v2897 = vmax.f32 %v2795, 0.0
      %v2898 = vmax.f32 %v2798, 0.0
      %v2899 = vmax.f32 %v2803, 0.0
      %v2900 = vmax.f32 %v2806, 0.0
      %v2901 = vmax.f32 %v2811, 0.0
      %v2902 = vmax.f32 %v2814, 0.0
      %v2903 = vmax.f32 %v2819, 0.0
      %v2904 = vmax.f32 %v2822, 0.0
      %v2905 = vmax.f32 %v2827, 0.0
      %v2906 = vmax.f32 %v2830, 0.0
      %v2907 = vmax.f32 %v2835, 0.0
      %v2908 = vmax.f32 %v2838, 0.0
      %v2909 = vmax.f32 %v2843, 0.0
      %v2910 = vmax.f32 %v2846, 0.0
      %v2911 = vmax.f32 %v2851, 0.0
      %v2912 = vmax.f32 %v2854, 0.0
      %v2913 = vmax.f32 %v2859, 0.0
      %v2914 = vmax.f32 %v2862, 0.0
      %v2915 = vmax.f32 %v2867, 0.0
      %v2916 = vmax.f32 %v2870, 0.0
      %v2917 = vmax.f32 %v2875, 0.0
      %v2918 = vmax.f32 %v2878, 0.0
      %v2919 = vmax.f32 %v2883, 0.0
      %v2920 = vmax.f32 %v2886, 0.0
      %2921 = vst.msk [vmem:[%s170] sm:$0xff] %vm2433, %v2889
      %2922 = vst.msk [vmem:[%s170 + $0x8] sm:$0xff] %vm2433, %v2890
      %2923 = vst.msk [vmem:[%s170 + $0x10] sm:$0xff] %vm2433, %v2891
      %2924 = vst.msk [vmem:[%s170 + $0x18] sm:$0xff] %vm2433, %v2892
      %2925 = vst.msk [vmem:[%s170 + $0x20] sm:$0xff] %vm2433, %v2893
      %2926 = vst.msk [vmem:[%s170 + $0x28] sm:$0xff] %vm2433, %v2894
      %2927 = vst.msk [vmem:[%s170 + $0x30] sm:$0xff] %vm2433, %v2895
      %2928 = vst.msk [vmem:[%s170 + $0x38] sm:$0xff] %vm2433, %v2896
      %2929 = vst.msk [vmem:[%s170 + $0x40] sm:$0xff] %vm2433, %v2897
      %2930 = vst.msk [vmem:[%s170 + $0x48] sm:$0xff] %vm2433, %v2898
      %2931 = vst.msk [vmem:[%s170 + $0x50] sm:$0xff] %vm2433, %v2899
      %2932 = vst.msk [vmem:[%s170 + $0x58] sm:$0xff] %vm2433, %v2900
      %2933 = vst.msk [vmem:[%s170 + $0x60] sm:$0xff] %vm2433, %v2901
      %2934 = vst.msk [vmem:[%s170 + $0x68] sm:$0xff] %vm2433, %v2902
      %2935 = vst.msk [vmem:[%s170 + $0x70] sm:$0xff] %vm2433, %v2903
      %2936 = vst.msk [vmem:[%s170 + $0x78] sm:$0xff] %vm2433, %v2904
      %2937 = vst.msk [vmem:[%s170 + $0x80] sm:$0xff] %vm2433, %v2905
      %2938 = vst.msk [vmem:[%s170 + $0x88] sm:$0xff] %vm2433, %v2906
      %2939 = vst.msk [vmem:[%s170 + $0x90] sm:$0xff] %vm2433, %v2907
      %2940 = vst.msk [vmem:[%s170 + $0x98] sm:$0xff] %vm2433, %v2908
      %2941 = vst.msk [vmem:[%s170 + $0xa0] sm:$0xff] %vm2433, %v2909
      %2942 = vst.msk [vmem:[%s170 + $0xa8] sm:$0xff] %vm2433, %v2910
      %2943 = vst.msk [vmem:[%s170 + $0xb0] sm:$0xff] %vm2433, %v2911
      %2944 = vst.msk [vmem:[%s170 + $0xb8] sm:$0xff] %vm2433, %v2912
      %2945 = vst.msk [vmem:[%s170 + $0xc0] sm:$0xff] %vm2433, %v2913
      %2946 = vst.msk [vmem:[%s170 + $0xc8] sm:$0xff] %vm2433, %v2914
      %2947 = vst.msk [vmem:[%s170 + $0xd0] sm:$0xff] %vm2433, %v2915
      %2948 = vst.msk [vmem:[%s170 + $0xd8] sm:$0xff] %vm2433, %v2916
      %2949 = vst.msk [vmem:[%s170 + $0xe0] sm:$0xff] %vm2433, %v2917
      %2950 = vst.msk [vmem:[%s170 + $0xe8] sm:$0xff] %vm2433, %v2918
      %2951 = vst.msk [vmem:[%s170 + $0xf0] sm:$0xff] %vm2433, %v2919
      %2952 = vst.msk [vmem:[%s170 + $0xf8] sm:$0xff] %vm2433, %v2920
      %p2953 = scmp.lt.s32.totalorder %s14, 1
      %s2954 = scalar_select %p2953, %s14, 1
      %s2955 = smul.addr %s2954, 32
      %s2956 = smul.addr %s2955, 8
      %s2957 = scalar_lea.vmem %s3, %s2956
      // Predicated region
      $region33: #{tpu_custom_call.1} parent=31 // pred_check
        %p2958 = pneg %p100
      $region34: #{tpu_custom_call.1} parent=31 // pred_check_branch
        %2960 = sbr.rel (%p2958) target = $region36
      $region35: #{tpu_custom_call.1} parent=31 // pred_region
        _
      $region36: #{tpu_custom_call.1} parent=31 // pred_fallthru
        _
    $region32: #{tpu_custom_call.1} parent=5 // pred_fallthru
      _
    %p2961 = scmp.le.s32.totalorder 2, %s9
    // Predicated region
    $region37: #{tpu_custom_call.1} parent=5 // pred_check
      %p2962 = pneg %p2961
    $region38: #{tpu_custom_call.1} parent=5 // pred_check_branch
      %2964 = sbr.rel (%p2962) target = $region40
    $region39: #{tpu_custom_call.1} parent=5 // pred_region
      %s2965 = ssub.s32 %s9, 2
      // Predicated region
      $region41: #{tpu_custom_call.1} parent=39 // pred_check
        %p2966 = pneg %p106
      $region42: #{tpu_custom_call.1} parent=39 // pred_check_branch
        %2968 = sbr.rel (%p2966) target = $region44
      $region43: #{tpu_custom_call.1} parent=39 // pred_region
        %p2969 = scmp.lt.s32.totalorder %s15, 1
        %s2970 = scalar_select %p2969, %s15, 1
        %s2971 = smul.addr %s2970, 32
        %s2972 = smul.addr %s2971, 8
        %s2973 = scalar_lea.vmem %s3, %s2972
      $region44: #{tpu_custom_call.1} parent=39 // pred_fallthru
        _
    $region40: #{tpu_custom_call.1} parent=5 // pred_fallthru
      _
  $region6: #{tpu_custom_call.1} parent=0 // loop_footer
    %s13 = sadd.s32 1, %s9
  $region7: #{tpu_custom_call.1} parent=0 // loop_footer_branch
    %8 = sbr.rel target = $region3
  $region8: #{tpu_custom_call.1} parent=0 // loop_exit
    _

</llo_original>
